<compile_context>
chip_gen: v7x
topology: tpu7x:2x2x1
jax: 0.10.0
libtpu: 0.0.40
codegen_flags: <defaults>
</compile_context>

<pallas_src>
import functools

import jax
import jax.numpy as jnp
from jax.experimental import pallas as pl
from jax.experimental.pallas import tpu as pltpu


def _round_up(x, m):
    return (x + m - 1) // m * m


def _cdiv(a, b):
    return (a + b - 1) // b


def _elu(x):
    # ELU with alpha=1.0 (F.elu default).  exp of the clamped value keeps the
    # unused branch finite; accuracy vs expm1 is far below the test tolerance.
    return jnp.where(x > 0, x, jnp.exp(jnp.minimum(x, 0.0)) - 1.0)


def dmix_kernel(s_ref, aq_ref, ws_ref, bs_ref, v2_ref, out_ref, *,
                n_agents, embed_dim, n_quantiles, pack):
    A, E, Q = n_agents, embed_dim, n_quantiles
    AE = A * E

    s = s_ref[...]                                           # (tile, S)
    aq = aq_ref[...]                                         # (tile, A*Q)

    # One fused MXU matmul: all four state-conditioned linear layers at once,
    # their biases added via the broadcast (1, D) bias row.
    h = jnp.dot(s, ws_ref[...], preferred_element_type=jnp.float32) + bs_ref[...]

    w1a = jnp.abs(h[:, 0:AE])                                # |hyper_w_1(s)|     (tile, A*E)
    b1 = h[:, AE:AE + E]                                     # hyper_b_1(s)       (tile, E)
    wf = jnp.abs(h[:, AE + E:AE + 2 * E])                    # |hyper_w_final(s)| (tile, E)
    vh = jnp.maximum(h[:, AE + 2 * E:AE + 3 * E], 0.0)       # relu(V_1(s))       (tile, E)
    v2b = h[:, AE + 3 * E:AE + 3 * E + 1]                    # V output bias      (tile, 1)

    inv_q = 1.0 / Q
    # Distributional reductions, exact on the VPU/XLU (no MXU columns burned).
    q_mix = aq[:, 0:Q]
    for a in range(1, A):                                    # A is small & static
        q_mix = q_mix + aq[:, a * Q:(a + 1) * Q]             # sum_a agent_qs     (tile, Q)
    q_sum = jnp.sum(q_mix, axis=1, keepdims=True) * inv_q    # sum_a mean_q       (tile, 1)

    # th.bmm(q_mean, w1): per-agent quantile mean broadcast over that agent's
    # E hidden lanes; unrolled over the (static, small) agent count.
    hidden_pre = b1
    for a in range(A):
        qa = jnp.sum(aq[:, a * Q:(a + 1) * Q], axis=1, keepdims=True) * inv_q
        hidden_pre = hidden_pre + qa * w1a[:, a * E:(a + 1) * E]
    hidden = _elu(hidden_pre)                                # (tile, E)

    # y = hidden @ w_final + V(s): both E->1 maps fused into one lane reduce.
    y = jnp.sum(hidden * wf + vh * v2_ref[...], axis=1, keepdims=True) + v2b   # (tile, 1)

    out2d = q_mix + (y - q_sum)                              # (tile, Q)

    # Lane-dense store: pack `pack` row-blocks of the tile into 128-wide rows.
    tile = out2d.shape[0]
    r = tile // pack
    out_ref[...] = jnp.concatenate(
        [out2d[j * r:(j + 1) * r, :] for j in range(pack)], axis=1)


def _pack_state_weights(params, n_agents, embed_dim, state_dim):
    """Pack the four state hypernet layers into one (S, D) weight + (1, D) bias.

    Columns: [ hyper_w_1 (A*E) | hyper_b_1 (E) | hyper_w_final (E) | V layer 1 (E)
             | V layer-2 bias (constant column, 1) | zero pad to a 128 multiple ]
    """
    A, E, S = n_agents, embed_dim, state_dim
    AE = A * E
    D = _round_up(AE + 3 * E + 1, 128)
    w = jnp.zeros((S, D), jnp.float32)
    b = jnp.zeros((1, D), jnp.float32)

    col = 0
    w = w.at[:, col:col + AE].set(params["w1_w"].astype(jnp.float32))
    b = b.at[:, col:col + AE].set(params["w1_b"].reshape(1, AE).astype(jnp.float32))
    col += AE
    w = w.at[:, col:col + E].set(params["b1_w"].astype(jnp.float32))
    b = b.at[:, col:col + E].set(params["b1_b"].reshape(1, E).astype(jnp.float32))
    col += E
    w = w.at[:, col:col + E].set(params["wf_w"].astype(jnp.float32))
    b = b.at[:, col:col + E].set(params["wf_b"].reshape(1, E).astype(jnp.float32))
    col += E
    w = w.at[:, col:col + E].set(params["v1_w"].astype(jnp.float32))
    b = b.at[:, col:col + E].set(params["v1_b"].reshape(1, E).astype(jnp.float32))
    col += E
    # V output bias rides along as a constant column (broadcast by the bias row).
    b = b.at[:, col].set(params["v2_b"].reshape(()).astype(jnp.float32))
    return w, b


def dmixer_forward(agent_qs, states, params, *, tile_n=1024):
    B, T, A, Q = agent_qs.shape
    S = states.shape[-1]
    E = params["b1_b"].shape[-1]
    N = B * T
    AQ = A * Q

    # Output packing factor so the out block's last dim is 128-lane dense.
    pack = (128 // Q) if (Q <= 128 and 128 % Q == 0) else 1
    row_align = 8 * pack

    # Tile selection: as large as practical (amortizes the ~0.35us per grid
    # step), but keep >= 2 grid steps (v7x has two TensorCores) and prefer an
    # even step count so both cores get equal shares.  Tiny inputs collapse to
    # a single aligned tile.
    max_tile = _round_up(N, row_align)
    tile = min(_round_up(max(int(tile_n), row_align), row_align), max_tile)
    if N > row_align:
        steps = _cdiv(N, tile)
        if steps < 2:
            steps = 2
        elif steps % 2:
            steps += 1
        tile = max(row_align, _round_up(_cdiv(N, steps), row_align))
    n_pad = _round_up(N, tile)
    grid = n_pad // tile
    r = tile // pack

    # Inputs are passed straight through (contiguous reshapes are free); only a
    # ragged tail needs zero padding -- no concatenated X is materialized.
    s2 = states.reshape(N, S).astype(jnp.float32)
    aq2 = agent_qs.reshape(N, AQ).astype(jnp.float32)
    if n_pad != N:
        s2 = jnp.pad(s2, ((0, n_pad - N), (0, 0)))
        aq2 = jnp.pad(aq2, ((0, n_pad - N), (0, 0)))

    ws, bs = _pack_state_weights(params, A, E, S)            # (S, D), (1, D)
    D = ws.shape[1]
    v2_row = params["v2_w"].reshape(1, E).astype(jnp.float32)

    kernel = functools.partial(dmix_kernel, n_agents=A, embed_dim=E,
                               n_quantiles=Q, pack=pack)

    cost = pl.CostEstimate(
        flops=2 * n_pad * S * D + 8 * n_pad * (A * E + 2 * E + Q),
        transcendentals=n_pad * E,
        bytes_accessed=4 * (n_pad * (S + AQ + Q) + S * D + D + E),
    )

    # Per-step VMEM footprint (double-buffered s/aq blocks + the (tile, D) f32
    # h value) is ~ a few MB even at tile=2048, so the default scoped-VMEM
    # limit is fine on v5e/v6e/v7x; raise vmem_limit_bytes only for tile>4096.
    out_packed = pl.pallas_call(
        kernel,
        out_shape=jax.ShapeDtypeStruct((n_pad // pack, pack * Q), jnp.float32),
        grid_spec=pltpu.PrefetchScalarGridSpec(
            num_scalar_prefetch=0,
            grid=(grid,),
            in_specs=[pl.BlockSpec((tile, S), lambda i: (i, 0)),
                      pl.BlockSpec((tile, AQ), lambda i: (i, 0)),
                      pl.BlockSpec((S, D), lambda i: (0, 0)),
                      pl.BlockSpec((1, D), lambda i: (0, 0)),
                      pl.BlockSpec((1, E), lambda i: (0, 0))],
            out_specs=pl.BlockSpec((r, pack * Q), lambda i: (i, 0)),
        ),
        compiler_params=pltpu.CompilerParams(
            dimension_semantics=("parallel",)),
        cost_estimate=cost,
    )(s2, aq2, ws, bs, v2_row)

    # Un-pack: grid block g, packed row rr, lane group j  <->  row g*tile + j*r + rr.
    out = (out_packed.reshape(grid, r, pack, Q)
           .transpose(0, 2, 1, 3)
           .reshape(n_pad, Q))[:N]
    return out.reshape(B, T, 1, Q)


def make_params(key, state_dim, embed_dim, n_agents):
    ks = jax.random.split(key, 10)

    def lin(kw, kb, din, dout, scale=0.1):
        w = scale * jax.random.normal(kw, (din, dout), jnp.float32)
        b = scale * jax.random.normal(kb, (1, dout), jnp.float32)
        return w, b

    w1_w, w1_b = lin(ks[0], ks[1], state_dim, embed_dim * n_agents)
    b1_w, b1_b = lin(ks[2], ks[3], state_dim, embed_dim)
    wf_w, wf_b = lin(ks[4], ks[5], state_dim, embed_dim)
    v1_w, v1_b = lin(ks[6], ks[7], state_dim, embed_dim)
    v2_w, v2_b = lin(ks[8], ks[9], embed_dim, 1)
    return dict(w1_w=w1_w, w1_b=w1_b, b1_w=b1_w, b1_b=b1_b,
                wf_w=wf_w, wf_b=wf_b, v1_w=v1_w, v1_b=v1_b,
                v2_w=v2_w, v2_b=v2_b)


def dmixer_reference(agent_qs, states, params):
    """Pure-JAX reference mirroring the PyTorch forward exactly."""
    B, T, A, Q = agent_qs.shape
    S = states.shape[-1]
    E = params["b1_b"].shape[-1]
    N = B * T

    q_mixture = jnp.sum(agent_qs, axis=2, keepdims=True)          # (B,T,1,Q)
    q_vals_expected = jnp.mean(agent_qs, axis=3, keepdims=True)   # (B,T,A,1)
    q_vals_sum = jnp.sum(q_vals_expected, axis=2, keepdims=True)  # (B,T,1,1)

    aq = q_vals_expected.reshape(N, 1, A)
    s = states.reshape(N, S)
    w1 = jnp.abs(s @ params["w1_w"] + params["w1_b"]).reshape(N, A, E)
    b1 = (s @ params["b1_w"] + params["b1_b"]).reshape(N, 1, E)
    hidden = jax.nn.elu(jnp.einsum("nka,nae->nke", aq, w1) + b1)
    wf = jnp.abs(s @ params["wf_w"] + params["wf_b"]).reshape(N, E, 1)
    vh = jnp.maximum(s @ params["v1_w"] + params["v1_b"], 0.0)
    v = (vh @ params["v2_w"] + params["v2_b"]).reshape(N, 1, 1)
    y = jnp.einsum("nke,neo->nko", hidden, wf) + v
    q_joint_expected = y.reshape(B, T, 1, 1)

    return q_mixture - q_vals_sum + q_joint_expected              # (B,T,1,Q)


if __name__ == "__main__":
    # Small shapes implied by the module:
    B, T = 2, 8            # batch, episode length
    A = 4                  # n_agents
    S = 32                 # state_dim
    E = 32                 # mixing_embed_dim
    Q = 8                  # n_quantiles (target=False path)

    key = jax.random.PRNGKey(0)
    k_aq, k_s, k_p = jax.random.split(key, 3)
    agent_qs = jax.random.normal(k_aq, (B, T, A, Q), jnp.float32)
    states = jax.random.normal(k_s, (B, T, S), jnp.float32)
    params = make_params(k_p, S, E, A)

    out = dmixer_forward(agent_qs, states, params)
    out = jax.block_until_ready(out)
    assert out.shape == (B, T, 1, Q)

    # Reference at full f32 matmul precision; the kernel's in-MXU dot runs at
    # default precision (no HIGHEST multi-pass), so the tolerance is sized for
    # possible bf16-pass rounding in the hypernet matmul.
    with jax.default_matmul_precision("highest"):
        ref = dmixer_reference(agent_qs, states, params)
    ref = jax.block_until_ready(ref)
    assert jnp.allclose(out, ref, rtol=2e-2, atol=2e-2), "mismatch vs reference"

    print("KERNEL_OK")
</pallas_src>

<mosaic_0001>
module attributes {stable_mosaic.version = 11 : i64} {
  func.func @dmix_kernel(%arg0: i32, %arg1: memref<128x32xf32, #tpu.memory_space<vmem>>, %arg2: memref<128x32xf32, #tpu.memory_space<vmem>>, %arg3: memref<32x256xf32, #tpu.memory_space<vmem>>, %arg4: memref<1x256xf32, #tpu.memory_space<vmem>>, %arg5: memref<1x32xf32, #tpu.memory_space<vmem>>, %arg6: memref<8x128xf32, #tpu.memory_space<vmem>>) attributes {dimension_semantics = [#tpu.dimension_semantics<parallel>], iteration_bounds = array<i64: 1>, scalar_prefetch = 0 : i64, scratch_operands = 0 : i64, tpu.core_type = #tpu.core_type<tc>, window_params = [{transform_indices = @transform_0, window_bounds = array<i64: 128, 32>}, {transform_indices = @transform_1, window_bounds = array<i64: 128, 32>}, {pipeline_mode = #tpu.pipeline_mode<synchronous>, transform_indices = @transform_2, window_bounds = array<i64: 32, 256>}, {pipeline_mode = #tpu.pipeline_mode<synchronous>, transform_indices = @transform_3, window_bounds = array<i64: 1, 256>}, {pipeline_mode = #tpu.pipeline_mode<synchronous>, transform_indices = @transform_4, window_bounds = array<i64: 1, 32>}, {transform_indices = @transform_5, window_bounds = array<i64: 8, 128>}]} {
    %c0 = arith.constant 0 : index
    %c0_0 = arith.constant 0 : index
    %0 = vector.load %arg1[%c0, %c0_0] : memref<128x32xf32, #tpu.memory_space<vmem>>, vector<128x32xf32>
    %c0_1 = arith.constant 0 : index
    %c0_2 = arith.constant 0 : index
    %1 = vector.load %arg2[%c0_1, %c0_2] : memref<128x32xf32, #tpu.memory_space<vmem>>, vector<128x32xf32>
    %c0_3 = arith.constant 0 : index
    %c0_4 = arith.constant 0 : index
    %2 = vector.load %arg3[%c0_3, %c0_4] : memref<32x256xf32, #tpu.memory_space<vmem>>, vector<32x256xf32>
    %cst = arith.constant dense<0.000000e+00> : vector<128x256xf32>
    %3 = tpu.matmul %0, %2, %cst {dimension_numbers = #tpu.dot_dimension_numbers<[1], [0], [0], [1], [0, 0, 1, 1], [], []>} : vector<128x32xf32>, vector<32x256xf32>, vector<128x256xf32> -> vector<128x256xf32>
    %c0_5 = arith.constant 0 : index
    %c0_6 = arith.constant 0 : index
    %4 = vector.load %arg4[%c0_5, %c0_6] : memref<1x256xf32, #tpu.memory_space<vmem>>, vector<1x256xf32>
    %5 = vector.broadcast %4 : vector<1x256xf32> to vector<128x256xf32>
    %6 = arith.addf %3, %5 : vector<128x256xf32>
    %7 = vector.extract_strided_slice %6 {offsets = [0, 0], sizes = [128, 128], strides = [1, 1]} : vector<128x256xf32> to vector<128x128xf32>
    %8 = math.absf %7 : vector<128x128xf32>
    %9 = vector.extract_strided_slice %6 {offsets = [0, 128], sizes = [128, 32], strides = [1, 1]} : vector<128x256xf32> to vector<128x32xf32>
    %10 = vector.extract_strided_slice %6 {offsets = [0, 160], sizes = [128, 32], strides = [1, 1]} : vector<128x256xf32> to vector<128x32xf32>
    %11 = math.absf %10 : vector<128x32xf32>
    %12 = vector.extract_strided_slice %6 {offsets = [0, 192], sizes = [128, 32], strides = [1, 1]} : vector<128x256xf32> to vector<128x32xf32>
    %cst_7 = arith.constant 0.000000e+00 : f32
    %13 = vector.broadcast %cst_7 : f32 to vector<128x32xf32>
    %14 = arith.maximumf %12, %13 : vector<128x32xf32>
    %15 = vector.extract_strided_slice %6 {offsets = [0, 224], sizes = [128, 1], strides = [1, 1]} : vector<128x256xf32> to vector<128x1xf32>
    %16 = vector.extract_strided_slice %1 {offsets = [0, 0], sizes = [128, 8], strides = [1, 1]} : vector<128x32xf32> to vector<128x8xf32>
    %17 = vector.extract_strided_slice %1 {offsets = [0, 8], sizes = [128, 8], strides = [1, 1]} : vector<128x32xf32> to vector<128x8xf32>
    %18 = arith.addf %16, %17 : vector<128x8xf32>
    %19 = vector.extract_strided_slice %1 {offsets = [0, 16], sizes = [128, 8], strides = [1, 1]} : vector<128x32xf32> to vector<128x8xf32>
    %20 = arith.addf %18, %19 : vector<128x8xf32>
    %21 = vector.extract_strided_slice %1 {offsets = [0, 24], sizes = [128, 8], strides = [1, 1]} : vector<128x32xf32> to vector<128x8xf32>
    %22 = arith.addf %20, %21 : vector<128x8xf32>
    %cst_8 = arith.constant dense<0.000000e+00> : vector<128xf32>
    %23 = vector.multi_reduction <add>, %22, %cst_8 [1] : vector<128x8xf32> to vector<128xf32>
    %24 = vector.shape_cast %23 : vector<128xf32> to vector<128x1xf32>
    %cst_9 = arith.constant 1.250000e-01 : f32
    %25 = vector.broadcast %cst_9 : f32 to vector<128x1xf32>
    %26 = arith.mulf %24, %25 : vector<128x1xf32>
    %27 = vector.extract_strided_slice %1 {offsets = [0, 0], sizes = [128, 8], strides = [1, 1]} : vector<128x32xf32> to vector<128x8xf32>
    %cst_10 = arith.constant dense<0.000000e+00> : vector<128xf32>
    %28 = vector.multi_reduction <add>, %27, %cst_10 [1] : vector<128x8xf32> to vector<128xf32>
    %29 = vector.shape_cast %28 : vector<128xf32> to vector<128x1xf32>
    %cst_11 = arith.constant 1.250000e-01 : f32
    %30 = vector.broadcast %cst_11 : f32 to vector<128x1xf32>
    %31 = arith.mulf %29, %30 : vector<128x1xf32>
    %32 = vector.extract_strided_slice %8 {offsets = [0, 0], sizes = [128, 32], strides = [1, 1]} : vector<128x128xf32> to vector<128x32xf32>
    %33 = vector.broadcast %31 : vector<128x1xf32> to vector<128x32xf32>
    %34 = arith.mulf %33, %32 : vector<128x32xf32>
    %35 = arith.addf %9, %34 : vector<128x32xf32>
    %36 = vector.extract_strided_slice %1 {offsets = [0, 8], sizes = [128, 8], strides = [1, 1]} : vector<128x32xf32> to vector<128x8xf32>
    %cst_12 = arith.constant dense<0.000000e+00> : vector<128xf32>
    %37 = vector.multi_reduction <add>, %36, %cst_12 [1] : vector<128x8xf32> to vector<128xf32>
    %38 = vector.shape_cast %37 : vector<128xf32> to vector<128x1xf32>
    %cst_13 = arith.constant 1.250000e-01 : f32
    %39 = vector.broadcast %cst_13 : f32 to vector<128x1xf32>
    %40 = arith.mulf %38, %39 : vector<128x1xf32>
    %41 = vector.extract_strided_slice %8 {offsets = [0, 32], sizes = [128, 32], strides = [1, 1]} : vector<128x128xf32> to vector<128x32xf32>
    %42 = vector.broadcast %40 : vector<128x1xf32> to vector<128x32xf32>
    %43 = arith.mulf %42, %41 : vector<128x32xf32>
    %44 = arith.addf %35, %43 : vector<128x32xf32>
    %45 = vector.extract_strided_slice %1 {offsets = [0, 16], sizes = [128, 8], strides = [1, 1]} : vector<128x32xf32> to vector<128x8xf32>
    %cst_14 = arith.constant dense<0.000000e+00> : vector<128xf32>
    %46 = vector.multi_reduction <add>, %45, %cst_14 [1] : vector<128x8xf32> to vector<128xf32>
    %47 = vector.shape_cast %46 : vector<128xf32> to vector<128x1xf32>
    %cst_15 = arith.constant 1.250000e-01 : f32
    %48 = vector.broadcast %cst_15 : f32 to vector<128x1xf32>
    %49 = arith.mulf %47, %48 : vector<128x1xf32>
    %50 = vector.extract_strided_slice %8 {offsets = [0, 64], sizes = [128, 32], strides = [1, 1]} : vector<128x128xf32> to vector<128x32xf32>
    %51 = vector.broadcast %49 : vector<128x1xf32> to vector<128x32xf32>
    %52 = arith.mulf %51, %50 : vector<128x32xf32>
    %53 = arith.addf %44, %52 : vector<128x32xf32>
    %54 = vector.extract_strided_slice %1 {offsets = [0, 24], sizes = [128, 8], strides = [1, 1]} : vector<128x32xf32> to vector<128x8xf32>
    %cst_16 = arith.constant dense<0.000000e+00> : vector<128xf32>
    %55 = vector.multi_reduction <add>, %54, %cst_16 [1] : vector<128x8xf32> to vector<128xf32>
    %56 = vector.shape_cast %55 : vector<128xf32> to vector<128x1xf32>
    %cst_17 = arith.constant 1.250000e-01 : f32
    %57 = vector.broadcast %cst_17 : f32 to vector<128x1xf32>
    %58 = arith.mulf %56, %57 : vector<128x1xf32>
    %59 = vector.extract_strided_slice %8 {offsets = [0, 96], sizes = [128, 32], strides = [1, 1]} : vector<128x128xf32> to vector<128x32xf32>
    %60 = vector.broadcast %58 : vector<128x1xf32> to vector<128x32xf32>
    %61 = arith.mulf %60, %59 : vector<128x32xf32>
    %62 = arith.addf %53, %61 : vector<128x32xf32>
    %cst_18 = arith.constant 0.000000e+00 : f32
    %63 = vector.broadcast %cst_18 : f32 to vector<128x32xf32>
    %64 = arith.cmpf ogt, %62, %63 : vector<128x32xf32>
    %cst_19 = arith.constant 0.000000e+00 : f32
    %65 = vector.broadcast %cst_19 : f32 to vector<128x32xf32>
    %66 = arith.minimumf %62, %65 : vector<128x32xf32>
    %67 = math.exp %66 : vector<128x32xf32>
    %cst_20 = arith.constant 1.000000e+00 : f32
    %68 = vector.broadcast %cst_20 : f32 to vector<128x32xf32>
    %69 = arith.subf %67, %68 : vector<128x32xf32>
    %70 = arith.select %64, %62, %69 : vector<128x32xi1>, vector<128x32xf32>
    %71 = arith.mulf %70, %11 : vector<128x32xf32>
    %c0_21 = arith.constant 0 : index
    %c0_22 = arith.constant 0 : index
    %72 = vector.load %arg5[%c0_21, %c0_22] : memref<1x32xf32, #tpu.memory_space<vmem>>, vector<1x32xf32>
    %73 = vector.broadcast %72 : vector<1x32xf32> to vector<128x32xf32>
    %74 = arith.mulf %14, %73 : vector<128x32xf32>
    %75 = arith.addf %71, %74 : vector<128x32xf32>
    %cst_23 = arith.constant dense<0.000000e+00> : vector<128xf32>
    %76 = vector.multi_reduction <add>, %75, %cst_23 [1] : vector<128x32xf32> to vector<128xf32>
    %77 = vector.shape_cast %76 : vector<128xf32> to vector<128x1xf32>
    %78 = arith.addf %77, %15 : vector<128x1xf32>
    %79 = arith.subf %78, %26 : vector<128x1xf32>
    %80 = vector.broadcast %79 : vector<128x1xf32> to vector<128x8xf32>
    %81 = arith.addf %22, %80 : vector<128x8xf32>
    %82 = vector.extract_strided_slice %81 {offsets = [0, 0], sizes = [8, 8], strides = [1, 1]} : vector<128x8xf32> to vector<8x8xf32>
    %83 = vector.extract_strided_slice %81 {offsets = [8, 0], sizes = [8, 8], strides = [1, 1]} : vector<128x8xf32> to vector<8x8xf32>
    %84 = vector.extract_strided_slice %81 {offsets = [16, 0], sizes = [8, 8], strides = [1, 1]} : vector<128x8xf32> to vector<8x8xf32>
    %85 = vector.extract_strided_slice %81 {offsets = [24, 0], sizes = [8, 8], strides = [1, 1]} : vector<128x8xf32> to vector<8x8xf32>
    %86 = vector.extract_strided_slice %81 {offsets = [32, 0], sizes = [8, 8], strides = [1, 1]} : vector<128x8xf32> to vector<8x8xf32>
    %87 = vector.extract_strided_slice %81 {offsets = [40, 0], sizes = [8, 8], strides = [1, 1]} : vector<128x8xf32> to vector<8x8xf32>
    %88 = vector.extract_strided_slice %81 {offsets = [48, 0], sizes = [8, 8], strides = [1, 1]} : vector<128x8xf32> to vector<8x8xf32>
    %89 = vector.extract_strided_slice %81 {offsets = [56, 0], sizes = [8, 8], strides = [1, 1]} : vector<128x8xf32> to vector<8x8xf32>
    %90 = vector.extract_strided_slice %81 {offsets = [64, 0], sizes = [8, 8], strides = [1, 1]} : vector<128x8xf32> to vector<8x8xf32>
    %91 = vector.extract_strided_slice %81 {offsets = [72, 0], sizes = [8, 8], strides = [1, 1]} : vector<128x8xf32> to vector<8x8xf32>
    %92 = vector.extract_strided_slice %81 {offsets = [80, 0], sizes = [8, 8], strides = [1, 1]} : vector<128x8xf32> to vector<8x8xf32>
    %93 = vector.extract_strided_slice %81 {offsets = [88, 0], sizes = [8, 8], strides = [1, 1]} : vector<128x8xf32> to vector<8x8xf32>
    %94 = vector.extract_strided_slice %81 {offsets = [96, 0], sizes = [8, 8], strides = [1, 1]} : vector<128x8xf32> to vector<8x8xf32>
    %95 = vector.extract_strided_slice %81 {offsets = [104, 0], sizes = [8, 8], strides = [1, 1]} : vector<128x8xf32> to vector<8x8xf32>
    %96 = vector.extract_strided_slice %81 {offsets = [112, 0], sizes = [8, 8], strides = [1, 1]} : vector<128x8xf32> to vector<8x8xf32>
    %97 = vector.extract_strided_slice %81 {offsets = [120, 0], sizes = [8, 8], strides = [1, 1]} : vector<128x8xf32> to vector<8x8xf32>
    %98 = tpu.concatenate %82, %83, %84, %85, %86, %87, %88, %89, %90, %91, %92, %93, %94, %95, %96, %97 in 1 : vector<8x8xf32>, vector<8x8xf32>, vector<8x8xf32>, vector<8x8xf32>, vector<8x8xf32>, vector<8x8xf32>, vector<8x8xf32>, vector<8x8xf32>, vector<8x8xf32>, vector<8x8xf32>, vector<8x8xf32>, vector<8x8xf32>, vector<8x8xf32>, vector<8x8xf32>, vector<8x8xf32>, vector<8x8xf32> -> vector<8x128xf32>
    %c0_24 = arith.constant 0 : index
    %c0_25 = arith.constant 0 : index
    %99 = vector.load %arg6[%c0_24, %c0_25] : memref<8x128xf32, #tpu.memory_space<vmem>>, vector<8x128xf32>
    tpu.vector_store %arg6[%c0_24, %c0_25], %98 {strides = array<i32>} : memref<8x128xf32, #tpu.memory_space<vmem>>, vector<8x128xf32>,
    return
  }
  func.func @transform_0(%arg0: i32) -> (i32, i32) {
    %c0_i32 = arith.constant 0 : i32
    %c0_i32_0 = arith.constant 0 : i32
    return %arg0, %c0_i32 : i32, i32
  }
  func.func @transform_1(%arg0: i32) -> (i32, i32) {
    %c0_i32 = arith.constant 0 : i32
    %c0_i32_0 = arith.constant 0 : i32
    return %arg0, %c0_i32 : i32, i32
  }
  func.func @transform_2(%arg0: i32) -> (i32, i32) {
    %c0_i32 = arith.constant 0 : i32
    %c0_i32_0 = arith.constant 0 : i32
    %c0_i32_1 = arith.constant 0 : i32
    return %c0_i32, %c0_i32_0 : i32, i32
  }
  func.func @transform_3(%arg0: i32) -> (i32, i32) {
    %c0_i32 = arith.constant 0 : i32
    %c0_i32_0 = arith.constant 0 : i32
    %c0_i32_1 = arith.constant 0 : i32
    return %c0_i32, %c0_i32_0 : i32, i32
  }
  func.func @transform_4(%arg0: i32) -> (i32, i32) {
    %c0_i32 = arith.constant 0 : i32
    %c0_i32_0 = arith.constant 0 : i32
    %c0_i32_1 = arith.constant 0 : i32
    return %c0_i32, %c0_i32_0 : i32, i32
  }
  func.func @transform_5(%arg0: i32) -> (i32, i32) {
    %c0_i32 = arith.constant 0 : i32
    %c0_i32_0 = arith.constant 0 : i32
    return %arg0, %c0_i32 : i32, i32
  }
}

</mosaic_0001>

<llo_original>
// kernel: tpu_custom_call.1
$region0: #{tpu_custom_call.1}
  #allocation0 [shape = 'u32[]', space=smem, size = 0x4, offset = 0x4, fixed_abs, tag = 'smem constant byte address 0x4 - core index']
  #allocation1 [shape = 'u32[144,128]{1,0:T(1,128)}', space=vmem, size = 0x12000, scoped, tag = 'internal scratch']
  %s0 = inlined_call_operand.vmem [shape: f32[128,32], index: 0, kind: input, shape index: {}]
  %s1 = inlined_call_operand.vmem [shape: f32[128,32], index: 1, kind: input, shape index: {}]
  %s2 = inlined_call_operand.vmem [shape: f32[32,256], index: 2, kind: input, shape index: {}]
  %s3 = inlined_call_operand.vmem [shape: f32[1,256], index: 3, kind: input, shape index: {}]
  %s4 = inlined_call_operand.vmem [shape: f32[1,32], index: 4, kind: input, shape index: {}]
  %s5 = inlined_call_operand.hbm [shape: f32[8,128], index: 5, kind: output, shape index: {}]
  %s6 = sld [smem:[#allocation0]]
  $region30: #{tpu_custom_call.1} parent=0
    _
  %s8 = ssub.s32 1, %s6
  %s9 = scalar_select 0, %s8, %s6
  $region1: #{tpu_custom_call.1} parent=0
    #allocation2 [shape = 'u8[4096]{0}', space=vmem, size = 0x1000, scoped, tag = 'output window, operand 0, single buffered']
    #allocation3 [shape = 's32[1]{0}', space=sflag, size = 0x4, scoped, tag = 'scoped memory for tpu_custom_call.1']
    %10 = vsyncpa [#allocation3], 0
    // Predicated region
    $region2: #{tpu_custom_call.1} parent=1 // pred_check
      _
    $region3: #{tpu_custom_call.1} parent=1 // pred_check_branch
      %12 = sbr.rel (0) target = $region5
    $region4: #{tpu_custom_call.1} parent=1 // pred_region
      _
    $region5: #{tpu_custom_call.1} parent=1 // pred_fallthru
      _
    // Predicated region
    $region6: #{tpu_custom_call.1} parent=1 // pred_check
      _
    $region7: #{tpu_custom_call.1} parent=1 // pred_check_branch
      %14 = sbr.rel (0) target = $region9
    $region8: #{tpu_custom_call.1} parent=1 // pred_region
      _
    $region9: #{tpu_custom_call.1} parent=1 // pred_fallthru
      _
    // Predicated region
    $region10: #{tpu_custom_call.1} parent=1 // pred_check
      _
    $region11: #{tpu_custom_call.1} parent=1 // pred_check_branch
      %16 = sbr.rel (0) target = $region13
    $region12: #{tpu_custom_call.1} parent=1 // pred_region
      _
    $region13: #{tpu_custom_call.1} parent=1 // pred_fallthru
      _
    // Predicated region
    $region14: #{tpu_custom_call.1} parent=1 // pred_check
      _
    $region15: #{tpu_custom_call.1} parent=1 // pred_check_branch
      %18 = sbr.rel (0) target = $region17
    $region16: #{tpu_custom_call.1} parent=1 // pred_region
      _
    $region17: #{tpu_custom_call.1} parent=1 // pred_fallthru
      _
    // Predicated region
    $region18: #{tpu_custom_call.1} parent=1 // pred_check
      _
    $region19: #{tpu_custom_call.1} parent=1 // pred_check_branch
      %20 = sbr.rel (0) target = $region21
    $region20: #{tpu_custom_call.1} parent=1 // pred_region
      _
    $region21: #{tpu_custom_call.1} parent=1 // pred_fallthru
      _
    %v21 = vld [vmem:[%s0] sm:$0xff]
    %v22 = vld [vmem:[%s0 + $0x8] sm:$0xff]
    %v23 = vld [vmem:[%s0 + $0x10] sm:$0xff]
    %v24 = vld [vmem:[%s0 + $0x18] sm:$0xff]
    %v25 = vld [vmem:[%s0 + $0x20] sm:$0xff]
    %v26 = vld [vmem:[%s0 + $0x28] sm:$0xff]
    %v27 = vld [vmem:[%s0 + $0x30] sm:$0xff]
    %v28 = vld [vmem:[%s0 + $0x38] sm:$0xff]
    %v29 = vld [vmem:[%s0 + $0x40] sm:$0xff]
    %v30 = vld [vmem:[%s0 + $0x48] sm:$0xff]
    %v31 = vld [vmem:[%s0 + $0x50] sm:$0xff]
    %v32 = vld [vmem:[%s0 + $0x58] sm:$0xff]
    %v33 = vld [vmem:[%s0 + $0x60] sm:$0xff]
    %v34 = vld [vmem:[%s0 + $0x68] sm:$0xff]
    %v35 = vld [vmem:[%s0 + $0x70] sm:$0xff]
    %v36 = vld [vmem:[%s0 + $0x78] sm:$0xff]
    %v37 = vld [vmem:[%s1] sm:$0xff]
    %v38 = vld [vmem:[%s1 + $0x8] sm:$0xff]
    %v39 = vld [vmem:[%s1 + $0x10] sm:$0xff]
    %v40 = vld [vmem:[%s1 + $0x18] sm:$0xff]
    %v41 = vld [vmem:[%s1 + $0x20] sm:$0xff]
    %v42 = vld [vmem:[%s1 + $0x28] sm:$0xff]
    %v43 = vld [vmem:[%s1 + $0x30] sm:$0xff]
    %v44 = vld [vmem:[%s1 + $0x38] sm:$0xff]
    %v45 = vld [vmem:[%s1 + $0x40] sm:$0xff]
    %v46 = vld [vmem:[%s1 + $0x48] sm:$0xff]
    %v47 = vld [vmem:[%s1 + $0x50] sm:$0xff]
    %v48 = vld [vmem:[%s1 + $0x58] sm:$0xff]
    %v49 = vld [vmem:[%s1 + $0x60] sm:$0xff]
    %v50 = vld [vmem:[%s1 + $0x68] sm:$0xff]
    %v51 = vld [vmem:[%s1 + $0x70] sm:$0xff]
    %v52 = vld [vmem:[%s1 + $0x78] sm:$0xff]
    %v53 = vld [vmem:[%s2] sm:$0xff]
    %v54 = vld [vmem:[%s2 + $0x8] sm:$0xff]
    %v55 = vld [vmem:[%s2 + $0x10] sm:$0xff]
    %v56 = vld [vmem:[%s2 + $0x18] sm:$0xff]
    %v57 = vld [vmem:[%s2 + $0x20] sm:$0xff]
    %v58 = vld [vmem:[%s2 + $0x28] sm:$0xff]
    %v59 = vld [vmem:[%s2 + $0x30] sm:$0xff]
    %v60 = vld [vmem:[%s2 + $0x38] sm:$0xff]
    %v61 = vld [vmem:[%s3] sm:$0x3]
    %v63 = vlaneseq
    %v64 = vshrl.u32 %v63, 7
    %v65 = vsub.s32 0, %v64
    %v66 = vrot.slane %v61, %v65
    %v67 = vlaneseq
    %v68 = vshrl.u32 %v67, 7
    %v69 = vsub.s32 1, %v68
    %v70 = vrot.slane %v61, %v69
    %vm73 = vcmask 261120
    %v75 = vsel %vm73, %v21, 0
    %v78 = vsel %vm73, %v22, 0
    %v81 = vsel %vm73, %v23, 0
    %v84 = vsel %vm73, %v24, 0
    %v87 = vsel %vm73, %v25, 0
    %v90 = vsel %vm73, %v26, 0
    %v93 = vsel %vm73, %v27, 0
    %v96 = vsel %vm73, %v28, 0
    %v99 = vsel %vm73, %v29, 0
    %v102 = vsel %vm73, %v30, 0
    %v105 = vsel %vm73, %v31, 0
    %v108 = vsel %vm73, %v32, 0
    %v111 = vsel %vm73, %v33, 0
    %v114 = vsel %vm73, %v34, 0
    %v117 = vsel %vm73, %v35, 0
    %v120 = vsel %vm73, %v36, 0
    %122 = vmatprep.subr.mxu0 %v54
    %123 = vmatpush1.msra.mxu0 %v53
    %124 = vmatprep.subr.mxu0 %v56
    %125 = vmatpush1.msra.mxu0 %v55
    %126 = vmatprep.subr.mxu0 %v58
    %127 = vmatpush1.msra.mxu0 %v57
    %128 = vmatprep.subr.mxu0 %v60
    %129 = vmatpush1.msra.mxu0 %v59
    %130 = vmatprep.subr.mxu0 0.0
    %131 = vmatpush1.msra.mxu0 0.0
    %132 = vmatprep.subr.mxu0 0.0
    %133 = vmatpush1.msra.mxu0 0.0
    %134 = vmatprep.subr.mxu0 0.0
    %135 = vmatpush1.msra.mxu0 0.0
    %136 = vmatprep.subr.mxu0 0.0
    %137 = vmatpush1.msra.mxu0 0.0
    %138 = vmatprep.subr.mxu0 0.0
    %139 = vmatpush1.msra.mxu0 0.0
    %140 = vmatprep.subr.mxu0 0.0
    %141 = vmatpush1.msra.mxu0 0.0
    %142 = vmatprep.subr.mxu0 0.0
    %143 = vmatpush1.msra.mxu0 0.0
    %144 = vmatprep.subr.mxu0 0.0
    %145 = vmatpush1.msra.mxu0 0.0
    %146 = vmatprep.subr.mxu0 0.0
    %147 = vmatpush1.msra.mxu0 0.0
    %148 = vmatprep.subr.mxu0 0.0
    %149 = vmatpush1.msra.mxu0 0.0
    %150 = vmatprep.subr.mxu0 0.0
    %151 = vmatpush1.msra.mxu0 0.0
    %152 = vmatprep.subr.mxu0 0.0
    %153 = vmatpush1.msra.mxu0 0.0
    %154 = vmatprep.subr.mxu0 0.0
    %155 = vmatpush1.msra.mxu0 0.0
    %156 = vmatprep.subr.mxu0 0.0
    %157 = vmatpush1.msra.mxu0 0.0
    %158 = vmatprep.subr.mxu0 0.0
    %159 = vmatpush1.msra.mxu0 0.0
    %160 = vmatprep.subr.mxu0 0.0
    %161 = vmatpush1.msra.mxu0 0.0
    %162 = vmatprep.subr.mxu0 0.0
    %163 = vmatpush1.msra.mxu0 0.0
    %164 = vmatprep.subr.mxu0 0.0
    %165 = vmatpush1.msra.mxu0 0.0
    %166 = vmatprep.subr.mxu0 0.0
    %167 = vmatpush1.msra.mxu0 0.0
    %168 = vmatprep.subr.mxu0 0.0
    %169 = vmatpush1.msra.mxu0 0.0
    %170 = vmatprep.subr.mxu0 0.0
    %171 = vmatpush1.msra.mxu0 0.0
    %172 = vmatprep.subr.mxu0 0.0
    %173 = vmatpush1.msra.mxu0 0.0
    %174 = vmatprep.subr.mxu0 0.0
    %175 = vmatpush1.msra.mxu0 0.0
    %176 = vmatprep.subr.mxu0 0.0
    %177 = vmatpush1.msra.mxu0 0.0
    %178 = vmatprep.subr.mxu0 0.0
    %179 = vmatpush1.msra.mxu0 0.0
    %180 = vmatprep.subr.mxu0 0.0
    %181 = vmatpush1.msra.mxu0 0.0
    %182 = vmatprep.subr.mxu0 0.0
    %183 = vmatpush1.msra.mxu0 0.0
    %184 = vmatprep.subr.mxu0 0.0
    %185 = vmatpush1.msra.mxu0 0.0
    %186 = vmatprep.mubr.f32.mxu0 0.0
    %187 = vmatmul.mubr.f32.gmra.mrb[0].mxu0 %v75
    %v188 = vpop.f32.mrb[0].mxu0
    %v189 = vadd.f32 %v66, %v188
    %v190 = vpop.f32.mrb[0].mxu0
    %v191 = vadd.f32 %v70, %v190
    %192 = vmatprep.mubr.f32.mxu0 0.0
    %193 = vmatmul.mubr.f32.gmra.mrb[0].mxu0 %v78
    %v194 = vpop.f32.mrb[0].mxu0
    %v195 = vadd.f32 %v66, %v194
    %v196 = vpop.f32.mrb[0].mxu0
    %v197 = vadd.f32 %v70, %v196
    %198 = vmatprep.mubr.f32.mxu0 0.0
    %199 = vmatmul.mubr.f32.gmra.mrb[0].mxu0 %v81
    %v200 = vpop.f32.mrb[0].mxu0
    %v201 = vadd.f32 %v66, %v200
    %v202 = vpop.f32.mrb[0].mxu0
    %v203 = vadd.f32 %v70, %v202
    %204 = vmatprep.mubr.f32.mxu0 0.0
    %205 = vmatmul.mubr.f32.gmra.mrb[0].mxu0 %v84
    %v206 = vpop.f32.mrb[0].mxu0
    %v207 = vadd.f32 %v66, %v206
    %v208 = vpop.f32.mrb[0].mxu0
    %v209 = vadd.f32 %v70, %v208
    %210 = vmatprep.mubr.f32.mxu0 0.0
    %211 = vmatmul.mubr.f32.gmra.mrb[0].mxu0 %v87
    %v212 = vpop.f32.mrb[0].mxu0
    %v213 = vadd.f32 %v66, %v212
    %v214 = vpop.f32.mrb[0].mxu0
    %v215 = vadd.f32 %v70, %v214
    %216 = vmatprep.mubr.f32.mxu0 0.0
    %217 = vmatmul.mubr.f32.gmra.mrb[0].mxu0 %v90
    %v218 = vpop.f32.mrb[0].mxu0
    %v219 = vadd.f32 %v66, %v218
    %v220 = vpop.f32.mrb[0].mxu0
    %v221 = vadd.f32 %v70, %v220
    %222 = vmatprep.mubr.f32.mxu0 0.0
    %223 = vmatmul.mubr.f32.gmra.mrb[0].mxu0 %v93
    %v224 = vpop.f32.mrb[0].mxu0
    %v225 = vadd.f32 %v66, %v224
    %v226 = vpop.f32.mrb[0].mxu0
    %v227 = vadd.f32 %v70, %v226
    %228 = vmatprep.mubr.f32.mxu0 0.0
    %229 = vmatmul.mubr.f32.gmra.mrb[0].mxu0 %v96
    %v230 = vpop.f32.mrb[0].mxu0
    %v231 = vadd.f32 %v66, %v230
    %v232 = vpop.f32.mrb[0].mxu0
    %v233 = vadd.f32 %v70, %v232
    %234 = vmatprep.mubr.f32.mxu0 0.0
    %235 = vmatmul.mubr.f32.gmra.mrb[0].mxu0 %v99
    %v236 = vpop.f32.mrb[0].mxu0
    %v237 = vadd.f32 %v66, %v236
    %v238 = vpop.f32.mrb[0].mxu0
    %v239 = vadd.f32 %v70, %v238
    %240 = vmatprep.mubr.f32.mxu0 0.0
    %241 = vmatmul.mubr.f32.gmra.mrb[0].mxu0 %v102
    %v242 = vpop.f32.mrb[0].mxu0
    %v243 = vadd.f32 %v66, %v242
    %v244 = vpop.f32.mrb[0].mxu0
    %v245 = vadd.f32 %v70, %v244
    %246 = vmatprep.mubr.f32.mxu0 0.0
    %247 = vmatmul.mubr.f32.gmra.mrb[0].mxu0 %v105
    %v248 = vpop.f32.mrb[0].mxu0
    %v249 = vadd.f32 %v66, %v248
    %v250 = vpop.f32.mrb[0].mxu0
    %v251 = vadd.f32 %v70, %v250
    %252 = vmatprep.mubr.f32.mxu0 0.0
    %253 = vmatmul.mubr.f32.gmra.mrb[0].mxu0 %v108
    %v254 = vpop.f32.mrb[0].mxu0
    %v255 = vadd.f32 %v66, %v254
    %v256 = vpop.f32.mrb[0].mxu0
    %v257 = vadd.f32 %v70, %v256
    %258 = vmatprep.mubr.f32.mxu0 0.0
    %259 = vmatmul.mubr.f32.gmra.mrb[0].mxu0 %v111
    %v260 = vpop.f32.mrb[0].mxu0
    %v261 = vadd.f32 %v66, %v260
    %v262 = vpop.f32.mrb[0].mxu0
    %v263 = vadd.f32 %v70, %v262
    %264 = vmatprep.mubr.f32.mxu0 0.0
    %265 = vmatmul.mubr.f32.gmra.mrb[0].mxu0 %v114
    %v266 = vpop.f32.mrb[0].mxu0
    %v267 = vadd.f32 %v66, %v266
    %v268 = vpop.f32.mrb[0].mxu0
    %v269 = vadd.f32 %v70, %v268
    %270 = vmatprep.mubr.f32.mxu0 0.0
    %271 = vmatmul.mubr.f32.gmra.mrb[0].mxu0 %v117
    %v272 = vpop.f32.mrb[0].mxu0
    %v273 = vadd.f32 %v66, %v272
    %v274 = vpop.f32.mrb[0].mxu0
    %v275 = vadd.f32 %v70, %v274
    %276 = vmatprep.mubr.f32.mxu0 0.0
    %277 = vmatmul.mubr.f32.gmra.mrb[0].mxu0 %v120
    %v278 = vpop.f32.mrb[0].mxu0
    %v279 = vadd.f32 %v66, %v278
    %v280 = vpop.f32.mrb[0].mxu0
    %v281 = vadd.f32 %v70, %v280
    %282 = vdwg.mxu0
    %v283 = vand.u32 2147483647, %v189
    %v284 = vand.u32 2147483647, %v195
    %v285 = vand.u32 2147483647, %v201
    %v286 = vand.u32 2147483647, %v207
    %v287 = vand.u32 2147483647, %v213
    %v288 = vand.u32 2147483647, %v219
    %v289 = vand.u32 2147483647, %v225
    %v290 = vand.u32 2147483647, %v231
    %v291 = vand.u32 2147483647, %v237
    %v292 = vand.u32 2147483647, %v243
    %v293 = vand.u32 2147483647, %v249
    %v294 = vand.u32 2147483647, %v255
    %v295 = vand.u32 2147483647, %v261
    %v296 = vand.u32 2147483647, %v267
    %v297 = vand.u32 2147483647, %v273
    %v298 = vand.u32 2147483647, %v279
    %v299 = vand.u32 2147483647, %v191
    %v300 = vand.u32 2147483647, %v197
    %v301 = vand.u32 2147483647, %v203
    %v302 = vand.u32 2147483647, %v209
    %v303 = vand.u32 2147483647, %v215
    %v304 = vand.u32 2147483647, %v221
    %v305 = vand.u32 2147483647, %v227
    %v306 = vand.u32 2147483647, %v233
    %v307 = vand.u32 2147483647, %v239
    %v308 = vand.u32 2147483647, %v245
    %v309 = vand.u32 2147483647, %v251
    %v310 = vand.u32 2147483647, %v257
    %v311 = vand.u32 2147483647, %v263
    %v312 = vand.u32 2147483647, %v269
    %v313 = vand.u32 2147483647, %v275
    %v314 = vand.u32 2147483647, %v281
    %v315 = vmax.f32 %v191, 0.0
    %v316 = vmax.f32 %v197, 0.0
    %v317 = vmax.f32 %v203, 0.0
    %v318 = vmax.f32 %v209, 0.0
    %v319 = vmax.f32 %v215, 0.0
    %v320 = vmax.f32 %v221, 0.0
    %v321 = vmax.f32 %v227, 0.0
    %v322 = vmax.f32 %v233, 0.0
    %v323 = vmax.f32 %v239, 0.0
    %v324 = vmax.f32 %v245, 0.0
    %v325 = vmax.f32 %v251, 0.0
    %v326 = vmax.f32 %v257, 0.0
    %v327 = vmax.f32 %v263, 0.0
    %v328 = vmax.f32 %v269, 0.0
    %v329 = vmax.f32 %v275, 0.0
    %v330 = vmax.f32 %v281, 0.0
    %347 = vrot.lane.b32.xlu0 %v37, 120
    %v348 = vpop.permute.xlu0 %347
    %349 = vrot.lane.b32.xlu0 %v38, 120
    %v350 = vpop.permute.xlu0 %349
    %351 = vrot.lane.b32.xlu0 %v39, 120
    %v352 = vpop.permute.xlu0 %351
    %353 = vrot.lane.b32.xlu0 %v40, 120
    %v354 = vpop.permute.xlu0 %353
    %355 = vrot.lane.b32.xlu0 %v41, 120
    %v356 = vpop.permute.xlu0 %355
    %357 = vrot.lane.b32.xlu0 %v42, 120
    %v358 = vpop.permute.xlu0 %357
    %359 = vrot.lane.b32.xlu0 %v43, 120
    %v360 = vpop.permute.xlu0 %359
    %361 = vrot.lane.b32.xlu0 %v44, 120
    %v362 = vpop.permute.xlu0 %361
    %363 = vrot.lane.b32.xlu0 %v45, 120
    %v364 = vpop.permute.xlu0 %363
    %365 = vrot.lane.b32.xlu0 %v46, 120
    %v366 = vpop.permute.xlu0 %365
    %367 = vrot.lane.b32.xlu0 %v47, 120
    %v368 = vpop.permute.xlu0 %367
    %369 = vrot.lane.b32.xlu0 %v48, 120
    %v370 = vpop.permute.xlu0 %369
    %371 = vrot.lane.b32.xlu0 %v49, 120
    %v372 = vpop.permute.xlu0 %371
    %373 = vrot.lane.b32.xlu0 %v50, 120
    %v374 = vpop.permute.xlu0 %373
    %375 = vrot.lane.b32.xlu0 %v51, 120
    %v376 = vpop.permute.xlu0 %375
    %377 = vrot.lane.b32.xlu0 %v52, 120
    %v378 = vpop.permute.xlu0 %377
    %v395 = vadd.f32 %v37, %v348
    %v396 = vadd.f32 %v38, %v350
    %v397 = vadd.f32 %v39, %v352
    %v398 = vadd.f32 %v40, %v354
    %v399 = vadd.f32 %v41, %v356
    %v400 = vadd.f32 %v42, %v358
    %v401 = vadd.f32 %v43, %v360
    %v402 = vadd.f32 %v44, %v362
    %v403 = vadd.f32 %v45, %v364
    %v404 = vadd.f32 %v46, %v366
    %v405 = vadd.f32 %v47, %v368
    %v406 = vadd.f32 %v48, %v370
    %v407 = vadd.f32 %v49, %v372
    %v408 = vadd.f32 %v50, %v374
    %v409 = vadd.f32 %v51, %v376
    %v410 = vadd.f32 %v52, %v378
    %411 = vrot.lane.b32.xlu0 %v37, 112
    %v412 = vpop.permute.xlu0 %411
    %413 = vrot.lane.b32.xlu0 %v38, 112
    %v414 = vpop.permute.xlu0 %413
    %415 = vrot.lane.b32.xlu0 %v39, 112
    %v416 = vpop.permute.xlu0 %415
    %417 = vrot.lane.b32.xlu0 %v40, 112
    %v418 = vpop.permute.xlu0 %417
    %419 = vrot.lane.b32.xlu0 %v41, 112
    %v420 = vpop.permute.xlu0 %419
    %421 = vrot.lane.b32.xlu0 %v42, 112
    %v422 = vpop.permute.xlu0 %421
    %423 = vrot.lane.b32.xlu0 %v43, 112
    %v424 = vpop.permute.xlu0 %423
    %425 = vrot.lane.b32.xlu0 %v44, 112
    %v426 = vpop.permute.xlu0 %425
    %427 = vrot.lane.b32.xlu0 %v45, 112
    %v428 = vpop.permute.xlu0 %427
    %429 = vrot.lane.b32.xlu0 %v46, 112
    %v430 = vpop.permute.xlu0 %429
    %431 = vrot.lane.b32.xlu0 %v47, 112
    %v432 = vpop.permute.xlu0 %431
    %433 = vrot.lane.b32.xlu0 %v48, 112
    %v434 = vpop.permute.xlu0 %433
    %435 = vrot.lane.b32.xlu0 %v49, 112
    %v436 = vpop.permute.xlu0 %435
    %437 = vrot.lane.b32.xlu0 %v50, 112
    %v438 = vpop.permute.xlu0 %437
    %439 = vrot.lane.b32.xlu0 %v51, 112
    %v440 = vpop.permute.xlu0 %439
    %441 = vrot.lane.b32.xlu0 %v52, 112
    %v442 = vpop.permute.xlu0 %441
    %v459 = vadd.f32 %v395, %v412
    %v460 = vadd.f32 %v396, %v414
    %v461 = vadd.f32 %v397, %v416
    %v462 = vadd.f32 %v398, %v418
    %v463 = vadd.f32 %v399, %v420
    %v464 = vadd.f32 %v400, %v422
    %v465 = vadd.f32 %v401, %v424
    %v466 = vadd.f32 %v402, %v426
    %v467 = vadd.f32 %v403, %v428
    %v468 = vadd.f32 %v404, %v430
    %v469 = vadd.f32 %v405, %v432
    %v470 = vadd.f32 %v406, %v434
    %v471 = vadd.f32 %v407, %v436
    %v472 = vadd.f32 %v408, %v438
    %v473 = vadd.f32 %v409, %v440
    %v474 = vadd.f32 %v410, %v442
    %475 = vrot.lane.b32.xlu0 %v37, 104
    %v476 = vpop.permute.xlu0 %475
    %477 = vrot.lane.b32.xlu0 %v38, 104
    %v478 = vpop.permute.xlu0 %477
    %479 = vrot.lane.b32.xlu0 %v39, 104
    %v480 = vpop.permute.xlu0 %479
    %481 = vrot.lane.b32.xlu0 %v40, 104
    %v482 = vpop.permute.xlu0 %481
    %483 = vrot.lane.b32.xlu0 %v41, 104
    %v484 = vpop.permute.xlu0 %483
    %485 = vrot.lane.b32.xlu0 %v42, 104
    %v486 = vpop.permute.xlu0 %485
    %487 = vrot.lane.b32.xlu0 %v43, 104
    %v488 = vpop.permute.xlu0 %487
    %489 = vrot.lane.b32.xlu0 %v44, 104
    %v490 = vpop.permute.xlu0 %489
    %491 = vrot.lane.b32.xlu0 %v45, 104
    %v492 = vpop.permute.xlu0 %491
    %493 = vrot.lane.b32.xlu0 %v46, 104
    %v494 = vpop.permute.xlu0 %493
    %495 = vrot.lane.b32.xlu0 %v47, 104
    %v496 = vpop.permute.xlu0 %495
    %497 = vrot.lane.b32.xlu0 %v48, 104
    %v498 = vpop.permute.xlu0 %497
    %499 = vrot.lane.b32.xlu0 %v49, 104
    %v500 = vpop.permute.xlu0 %499
    %501 = vrot.lane.b32.xlu0 %v50, 104
    %v502 = vpop.permute.xlu0 %501
    %503 = vrot.lane.b32.xlu0 %v51, 104
    %v504 = vpop.permute.xlu0 %503
    %505 = vrot.lane.b32.xlu0 %v52, 104
    %v506 = vpop.permute.xlu0 %505
    %v523 = vadd.f32 %v459, %v476
    %v524 = vadd.f32 %v460, %v478
    %v525 = vadd.f32 %v461, %v480
    %v526 = vadd.f32 %v462, %v482
    %v527 = vadd.f32 %v463, %v484
    %v528 = vadd.f32 %v464, %v486
    %v529 = vadd.f32 %v465, %v488
    %v530 = vadd.f32 %v466, %v490
    %v531 = vadd.f32 %v467, %v492
    %v532 = vadd.f32 %v468, %v494
    %v533 = vadd.f32 %v469, %v496
    %v534 = vadd.f32 %v470, %v498
    %v535 = vadd.f32 %v471, %v500
    %v536 = vadd.f32 %v472, %v502
    %v537 = vadd.f32 %v473, %v504
    %v538 = vadd.f32 %v474, %v506
    %vm539 = vcmask 64512
    %v540 = vsel %vm539, %v523, 0.0
    %541 = vadd.xlane.f32.xlu0 %v540
    %v542 = vpop.xlane.xlu0 %541
    %v543 = vsel %vm539, %v524, 0.0
    %544 = vadd.xlane.f32.xlu0 %v543
    %v545 = vpop.xlane.xlu0 %544
    %v546 = vsel %vm539, %v525, 0.0
    %547 = vadd.xlane.f32.xlu0 %v546
    %v548 = vpop.xlane.xlu0 %547
    %v549 = vsel %vm539, %v526, 0.0
    %550 = vadd.xlane.f32.xlu0 %v549
    %v551 = vpop.xlane.xlu0 %550
    %v552 = vsel %vm539, %v527, 0.0
    %553 = vadd.xlane.f32.xlu0 %v552
    %v554 = vpop.xlane.xlu0 %553
    %v555 = vsel %vm539, %v528, 0.0
    %556 = vadd.xlane.f32.xlu0 %v555
    %v557 = vpop.xlane.xlu0 %556
    %v558 = vsel %vm539, %v529, 0.0
    %559 = vadd.xlane.f32.xlu0 %v558
    %v560 = vpop.xlane.xlu0 %559
    %v561 = vsel %vm539, %v530, 0.0
    %562 = vadd.xlane.f32.xlu0 %v561
    %v563 = vpop.xlane.xlu0 %562
    %v564 = vsel %vm539, %v531, 0.0
    %565 = vadd.xlane.f32.xlu0 %v564
    %v566 = vpop.xlane.xlu0 %565
    %v567 = vsel %vm539, %v532, 0.0
    %568 = vadd.xlane.f32.xlu0 %v567
    %v569 = vpop.xlane.xlu0 %568
    %v570 = vsel %vm539, %v533, 0.0
    %571 = vadd.xlane.f32.xlu0 %v570
    %v572 = vpop.xlane.xlu0 %571
    %v573 = vsel %vm539, %v534, 0.0
    %574 = vadd.xlane.f32.xlu0 %v573
    %v575 = vpop.xlane.xlu0 %574
    %v576 = vsel %vm539, %v535, 0.0
    %577 = vadd.xlane.f32.xlu0 %v576
    %v578 = vpop.xlane.xlu0 %577
    %v579 = vsel %vm539, %v536, 0.0
    %580 = vadd.xlane.f32.xlu0 %v579
    %v581 = vpop.xlane.xlu0 %580
    %v582 = vsel %vm539, %v537, 0.0
    %583 = vadd.xlane.f32.xlu0 %v582
    %v584 = vpop.xlane.xlu0 %583
    %v585 = vsel %vm539, %v538, 0.0
    %586 = vadd.xlane.f32.xlu0 %v585
    %v587 = vpop.xlane.xlu0 %586
    %v588 = vmul.f32 %v542, 0.125
    %v589 = vmul.f32 %v545, 0.125
    %v590 = vmul.f32 %v548, 0.125
    %v591 = vmul.f32 %v551, 0.125
    %v592 = vmul.f32 %v554, 0.125
    %v593 = vmul.f32 %v557, 0.125
    %v594 = vmul.f32 %v560, 0.125
    %v595 = vmul.f32 %v563, 0.125
    %v596 = vmul.f32 %v566, 0.125
    %v597 = vmul.f32 %v569, 0.125
    %v598 = vmul.f32 %v572, 0.125
    %v599 = vmul.f32 %v575, 0.125
    %v600 = vmul.f32 %v578, 0.125
    %v601 = vmul.f32 %v581, 0.125
    %v602 = vmul.f32 %v584, 0.125
    %v603 = vmul.f32 %v587, 0.125
    %v604 = vsel %vm539, %v37, 0.0
    %605 = vadd.xlane.f32.xlu0 %v604
    %v606 = vpop.xlane.xlu0 %605
    %v607 = vsel %vm539, %v38, 0.0
    %608 = vadd.xlane.f32.xlu0 %v607
    %v609 = vpop.xlane.xlu0 %608
    %v610 = vsel %vm539, %v39, 0.0
    %611 = vadd.xlane.f32.xlu0 %v610
    %v612 = vpop.xlane.xlu0 %611
    %v613 = vsel %vm539, %v40, 0.0
    %614 = vadd.xlane.f32.xlu0 %v613
    %v615 = vpop.xlane.xlu0 %614
    %v616 = vsel %vm539, %v41, 0.0
    %617 = vadd.xlane.f32.xlu0 %v616
    %v618 = vpop.xlane.xlu0 %617
    %v619 = vsel %vm539, %v42, 0.0
    %620 = vadd.xlane.f32.xlu0 %v619
    %v621 = vpop.xlane.xlu0 %620
    %v622 = vsel %vm539, %v43, 0.0
    %623 = vadd.xlane.f32.xlu0 %v622
    %v624 = vpop.xlane.xlu0 %623
    %v625 = vsel %vm539, %v44, 0.0
    %626 = vadd.xlane.f32.xlu0 %v625
    %v627 = vpop.xlane.xlu0 %626
    %v628 = vsel %vm539, %v45, 0.0
    %629 = vadd.xlane.f32.xlu0 %v628
    %v630 = vpop.xlane.xlu0 %629
    %v631 = vsel %vm539, %v46, 0.0
    %632 = vadd.xlane.f32.xlu0 %v631
    %v633 = vpop.xlane.xlu0 %632
    %v634 = vsel %vm539, %v47, 0.0
    %635 = vadd.xlane.f32.xlu0 %v634
    %v636 = vpop.xlane.xlu0 %635
    %v637 = vsel %vm539, %v48, 0.0
    %638 = vadd.xlane.f32.xlu0 %v637
    %v639 = vpop.xlane.xlu0 %638
    %v640 = vsel %vm539, %v49, 0.0
    %641 = vadd.xlane.f32.xlu0 %v640
    %v642 = vpop.xlane.xlu0 %641
    %v643 = vsel %vm539, %v50, 0.0
    %644 = vadd.xlane.f32.xlu0 %v643
    %v645 = vpop.xlane.xlu0 %644
    %v646 = vsel %vm539, %v51, 0.0
    %647 = vadd.xlane.f32.xlu0 %v646
    %v648 = vpop.xlane.xlu0 %647
    %v649 = vsel %vm539, %v52, 0.0
    %650 = vadd.xlane.f32.xlu0 %v649
    %v651 = vpop.xlane.xlu0 %650
    %v652 = vmul.f32 %v606, 0.125
    %v653 = vmul.f32 %v609, 0.125
    %v654 = vmul.f32 %v612, 0.125
    %v655 = vmul.f32 %v615, 0.125
    %v656 = vmul.f32 %v618, 0.125
    %v657 = vmul.f32 %v621, 0.125
    %v658 = vmul.f32 %v624, 0.125
    %v659 = vmul.f32 %v627, 0.125
    %v660 = vmul.f32 %v630, 0.125
    %v661 = vmul.f32 %v633, 0.125
    %v662 = vmul.f32 %v636, 0.125
    %v663 = vmul.f32 %v639, 0.125
    %v664 = vmul.f32 %v642, 0.125
    %v665 = vmul.f32 %v645, 0.125
    %v666 = vmul.f32 %v648, 0.125
    %v667 = vmul.f32 %v651, 0.125
    %v668 = vmul.f32 %v652, %v283
    %v669 = vmul.f32 %v653, %v284
    %v670 = vmul.f32 %v654, %v285
    %v671 = vmul.f32 %v655, %v286
    %v672 = vmul.f32 %v656, %v287
    %v673 = vmul.f32 %v657, %v288
    %v674 = vmul.f32 %v658, %v289
    %v675 = vmul.f32 %v659, %v290
    %v676 = vmul.f32 %v660, %v291
    %v677 = vmul.f32 %v661, %v292
    %v678 = vmul.f32 %v662, %v293
    %v679 = vmul.f32 %v663, %v294
    %v680 = vmul.f32 %v664, %v295
    %v681 = vmul.f32 %v665, %v296
    %v682 = vmul.f32 %v666, %v297
    %v683 = vmul.f32 %v667, %v298
    %v684 = vadd.f32 %v191, %v668
    %v685 = vadd.f32 %v197, %v669
    %v686 = vadd.f32 %v203, %v670
    %v687 = vadd.f32 %v209, %v671
    %v688 = vadd.f32 %v215, %v672
    %v689 = vadd.f32 %v221, %v673
    %v690 = vadd.f32 %v227, %v674
    %v691 = vadd.f32 %v233, %v675
    %v692 = vadd.f32 %v239, %v676
    %v693 = vadd.f32 %v245, %v677
    %v694 = vadd.f32 %v251, %v678
    %v695 = vadd.f32 %v257, %v679
    %v696 = vadd.f32 %v263, %v680
    %v697 = vadd.f32 %v269, %v681
    %v698 = vadd.f32 %v275, %v682
    %v699 = vadd.f32 %v281, %v683
    %v700 = vsel %vm539, %v348, 0.0
    %701 = vadd.xlane.f32.xlu0 %v700
    %v702 = vpop.xlane.xlu0 %701
    %v703 = vsel %vm539, %v350, 0.0
    %704 = vadd.xlane.f32.xlu0 %v703
    %v705 = vpop.xlane.xlu0 %704
    %v706 = vsel %vm539, %v352, 0.0
    %707 = vadd.xlane.f32.xlu0 %v706
    %v708 = vpop.xlane.xlu0 %707
    %v709 = vsel %vm539, %v354, 0.0
    %710 = vadd.xlane.f32.xlu0 %v709
    %v711 = vpop.xlane.xlu0 %710
    %v712 = vsel %vm539, %v356, 0.0
    %713 = vadd.xlane.f32.xlu0 %v712
    %v714 = vpop.xlane.xlu0 %713
    %v715 = vsel %vm539, %v358, 0.0
    %716 = vadd.xlane.f32.xlu0 %v715
    %v717 = vpop.xlane.xlu0 %716
    %v718 = vsel %vm539, %v360, 0.0
    %719 = vadd.xlane.f32.xlu0 %v718
    %v720 = vpop.xlane.xlu0 %719
    %v721 = vsel %vm539, %v362, 0.0
    %722 = vadd.xlane.f32.xlu0 %v721
    %v723 = vpop.xlane.xlu0 %722
    %v724 = vsel %vm539, %v364, 0.0
    %725 = vadd.xlane.f32.xlu0 %v724
    %v726 = vpop.xlane.xlu0 %725
    %v727 = vsel %vm539, %v366, 0.0
    %728 = vadd.xlane.f32.xlu0 %v727
    %v729 = vpop.xlane.xlu0 %728
    %v730 = vsel %vm539, %v368, 0.0
    %731 = vadd.xlane.f32.xlu0 %v730
    %v732 = vpop.xlane.xlu0 %731
    %v733 = vsel %vm539, %v370, 0.0
    %734 = vadd.xlane.f32.xlu0 %v733
    %v735 = vpop.xlane.xlu0 %734
    %v736 = vsel %vm539, %v372, 0.0
    %737 = vadd.xlane.f32.xlu0 %v736
    %v738 = vpop.xlane.xlu0 %737
    %v739 = vsel %vm539, %v374, 0.0
    %740 = vadd.xlane.f32.xlu0 %v739
    %v741 = vpop.xlane.xlu0 %740
    %v742 = vsel %vm539, %v376, 0.0
    %743 = vadd.xlane.f32.xlu0 %v742
    %v744 = vpop.xlane.xlu0 %743
    %v745 = vsel %vm539, %v378, 0.0
    %746 = vadd.xlane.f32.xlu0 %v745
    %v747 = vpop.xlane.xlu0 %746
    %v748 = vmul.f32 %v702, 0.125
    %v749 = vmul.f32 %v705, 0.125
    %v750 = vmul.f32 %v708, 0.125
    %v751 = vmul.f32 %v711, 0.125
    %v752 = vmul.f32 %v714, 0.125
    %v753 = vmul.f32 %v717, 0.125
    %v754 = vmul.f32 %v720, 0.125
    %v755 = vmul.f32 %v723, 0.125
    %v756 = vmul.f32 %v726, 0.125
    %v757 = vmul.f32 %v729, 0.125
    %v758 = vmul.f32 %v732, 0.125
    %v759 = vmul.f32 %v735, 0.125
    %v760 = vmul.f32 %v738, 0.125
    %v761 = vmul.f32 %v741, 0.125
    %v762 = vmul.f32 %v744, 0.125
    %v763 = vmul.f32 %v747, 0.125
    %v764 = vmul.f32 %v748, %v283
    %v765 = vmul.f32 %v749, %v284
    %v766 = vmul.f32 %v750, %v285
    %v767 = vmul.f32 %v751, %v286
    %v768 = vmul.f32 %v752, %v287
    %v769 = vmul.f32 %v753, %v288
    %v770 = vmul.f32 %v754, %v289
    %v771 = vmul.f32 %v755, %v290
    %v772 = vmul.f32 %v756, %v291
    %v773 = vmul.f32 %v757, %v292
    %v774 = vmul.f32 %v758, %v293
    %v775 = vmul.f32 %v759, %v294
    %v776 = vmul.f32 %v760, %v295
    %v777 = vmul.f32 %v761, %v296
    %v778 = vmul.f32 %v762, %v297
    %v779 = vmul.f32 %v763, %v298
    %796 = vrot.lane.b32.xlu0 %v764, 96
    %v797 = vpop.permute.xlu0 %796
    %798 = vrot.lane.b32.xlu0 %v765, 96
    %v799 = vpop.permute.xlu0 %798
    %800 = vrot.lane.b32.xlu0 %v766, 96
    %v801 = vpop.permute.xlu0 %800
    %802 = vrot.lane.b32.xlu0 %v767, 96
    %v803 = vpop.permute.xlu0 %802
    %804 = vrot.lane.b32.xlu0 %v768, 96
    %v805 = vpop.permute.xlu0 %804
    %806 = vrot.lane.b32.xlu0 %v769, 96
    %v807 = vpop.permute.xlu0 %806
    %808 = vrot.lane.b32.xlu0 %v770, 96
    %v809 = vpop.permute.xlu0 %808
    %810 = vrot.lane.b32.xlu0 %v771, 96
    %v811 = vpop.permute.xlu0 %810
    %812 = vrot.lane.b32.xlu0 %v772, 96
    %v813 = vpop.permute.xlu0 %812
    %814 = vrot.lane.b32.xlu0 %v773, 96
    %v815 = vpop.permute.xlu0 %814
    %816 = vrot.lane.b32.xlu0 %v774, 96
    %v817 = vpop.permute.xlu0 %816
    %818 = vrot.lane.b32.xlu0 %v775, 96
    %v819 = vpop.permute.xlu0 %818
    %820 = vrot.lane.b32.xlu0 %v776, 96
    %v821 = vpop.permute.xlu0 %820
    %822 = vrot.lane.b32.xlu0 %v777, 96
    %v823 = vpop.permute.xlu0 %822
    %824 = vrot.lane.b32.xlu0 %v778, 96
    %v825 = vpop.permute.xlu0 %824
    %826 = vrot.lane.b32.xlu0 %v779, 96
    %v827 = vpop.permute.xlu0 %826
    %v844 = vadd.f32 %v684, %v797
    %v845 = vadd.f32 %v685, %v799
    %v846 = vadd.f32 %v686, %v801
    %v847 = vadd.f32 %v687, %v803
    %v848 = vadd.f32 %v688, %v805
    %v849 = vadd.f32 %v689, %v807
    %v850 = vadd.f32 %v690, %v809
    %v851 = vadd.f32 %v691, %v811
    %v852 = vadd.f32 %v692, %v813
    %v853 = vadd.f32 %v693, %v815
    %v854 = vadd.f32 %v694, %v817
    %v855 = vadd.f32 %v695, %v819
    %v856 = vadd.f32 %v696, %v821
    %v857 = vadd.f32 %v697, %v823
    %v858 = vadd.f32 %v698, %v825
    %v859 = vadd.f32 %v699, %v827
    %v860 = vsel %vm539, %v412, 0.0
    %861 = vadd.xlane.f32.xlu0 %v860
    %v862 = vpop.xlane.xlu0 %861
    %v863 = vsel %vm539, %v414, 0.0
    %864 = vadd.xlane.f32.xlu0 %v863
    %v865 = vpop.xlane.xlu0 %864
    %v866 = vsel %vm539, %v416, 0.0
    %867 = vadd.xlane.f32.xlu0 %v866
    %v868 = vpop.xlane.xlu0 %867
    %v869 = vsel %vm539, %v418, 0.0
    %870 = vadd.xlane.f32.xlu0 %v869
    %v871 = vpop.xlane.xlu0 %870
    %v872 = vsel %vm539, %v420, 0.0
    %873 = vadd.xlane.f32.xlu0 %v872
    %v874 = vpop.xlane.xlu0 %873
    %v875 = vsel %vm539, %v422, 0.0
    %876 = vadd.xlane.f32.xlu0 %v875
    %v877 = vpop.xlane.xlu0 %876
    %v878 = vsel %vm539, %v424, 0.0
    %879 = vadd.xlane.f32.xlu0 %v878
    %v880 = vpop.xlane.xlu0 %879
    %v881 = vsel %vm539, %v426, 0.0
    %882 = vadd.xlane.f32.xlu0 %v881
    %v883 = vpop.xlane.xlu0 %882
    %v884 = vsel %vm539, %v428, 0.0
    %885 = vadd.xlane.f32.xlu0 %v884
    %v886 = vpop.xlane.xlu0 %885
    %v887 = vsel %vm539, %v430, 0.0
    %888 = vadd.xlane.f32.xlu0 %v887
    %v889 = vpop.xlane.xlu0 %888
    %v890 = vsel %vm539, %v432, 0.0
    %891 = vadd.xlane.f32.xlu0 %v890
    %v892 = vpop.xlane.xlu0 %891
    %v893 = vsel %vm539, %v434, 0.0
    %894 = vadd.xlane.f32.xlu0 %v893
    %v895 = vpop.xlane.xlu0 %894
    %v896 = vsel %vm539, %v436, 0.0
    %897 = vadd.xlane.f32.xlu0 %v896
    %v898 = vpop.xlane.xlu0 %897
    %v899 = vsel %vm539, %v438, 0.0
    %900 = vadd.xlane.f32.xlu0 %v899
    %v901 = vpop.xlane.xlu0 %900
    %v902 = vsel %vm539, %v440, 0.0
    %903 = vadd.xlane.f32.xlu0 %v902
    %v904 = vpop.xlane.xlu0 %903
    %v905 = vsel %vm539, %v442, 0.0
    %906 = vadd.xlane.f32.xlu0 %v905
    %v907 = vpop.xlane.xlu0 %906
    %v908 = vmul.f32 %v862, 0.125
    %v909 = vmul.f32 %v865, 0.125
    %v910 = vmul.f32 %v868, 0.125
    %v911 = vmul.f32 %v871, 0.125
    %v912 = vmul.f32 %v874, 0.125
    %v913 = vmul.f32 %v877, 0.125
    %v914 = vmul.f32 %v880, 0.125
    %v915 = vmul.f32 %v883, 0.125
    %v916 = vmul.f32 %v886, 0.125
    %v917 = vmul.f32 %v889, 0.125
    %v918 = vmul.f32 %v892, 0.125
    %v919 = vmul.f32 %v895, 0.125
    %v920 = vmul.f32 %v898, 0.125
    %v921 = vmul.f32 %v901, 0.125
    %v922 = vmul.f32 %v904, 0.125
    %v923 = vmul.f32 %v907, 0.125
    %v924 = vmul.f32 %v908, %v283
    %v925 = vmul.f32 %v909, %v284
    %v926 = vmul.f32 %v910, %v285
    %v927 = vmul.f32 %v911, %v286
    %v928 = vmul.f32 %v912, %v287
    %v929 = vmul.f32 %v913, %v288
    %v930 = vmul.f32 %v914, %v289
    %v931 = vmul.f32 %v915, %v290
    %v932 = vmul.f32 %v916, %v291
    %v933 = vmul.f32 %v917, %v292
    %v934 = vmul.f32 %v918, %v293
    %v935 = vmul.f32 %v919, %v294
    %v936 = vmul.f32 %v920, %v295
    %v937 = vmul.f32 %v921, %v296
    %v938 = vmul.f32 %v922, %v297
    %v939 = vmul.f32 %v923, %v298
    %956 = vrot.lane.b32.xlu0 %v924, 64
    %v957 = vpop.permute.xlu0 %956
    %958 = vrot.lane.b32.xlu0 %v925, 64
    %v959 = vpop.permute.xlu0 %958
    %960 = vrot.lane.b32.xlu0 %v926, 64
    %v961 = vpop.permute.xlu0 %960
    %962 = vrot.lane.b32.xlu0 %v927, 64
    %v963 = vpop.permute.xlu0 %962
    %964 = vrot.lane.b32.xlu0 %v928, 64
    %v965 = vpop.permute.xlu0 %964
    %966 = vrot.lane.b32.xlu0 %v929, 64
    %v967 = vpop.permute.xlu0 %966
    %968 = vrot.lane.b32.xlu0 %v930, 64
    %v969 = vpop.permute.xlu0 %968
    %970 = vrot.lane.b32.xlu0 %v931, 64
    %v971 = vpop.permute.xlu0 %970
    %972 = vrot.lane.b32.xlu0 %v932, 64
    %v973 = vpop.permute.xlu0 %972
    %974 = vrot.lane.b32.xlu0 %v933, 64
    %v975 = vpop.permute.xlu0 %974
    %976 = vrot.lane.b32.xlu0 %v934, 64
    %v977 = vpop.permute.xlu0 %976
    %978 = vrot.lane.b32.xlu0 %v935, 64
    %v979 = vpop.permute.xlu0 %978
    %980 = vrot.lane.b32.xlu0 %v936, 64
    %v981 = vpop.permute.xlu0 %980
    %982 = vrot.lane.b32.xlu0 %v937, 64
    %v983 = vpop.permute.xlu0 %982
    %984 = vrot.lane.b32.xlu0 %v938, 64
    %v985 = vpop.permute.xlu0 %984
    %986 = vrot.lane.b32.xlu0 %v939, 64
    %v987 = vpop.permute.xlu0 %986
    %v1004 = vadd.f32 %v844, %v957
    %v1005 = vadd.f32 %v845, %v959
    %v1006 = vadd.f32 %v846, %v961
    %v1007 = vadd.f32 %v847, %v963
    %v1008 = vadd.f32 %v848, %v965
    %v1009 = vadd.f32 %v849, %v967
    %v1010 = vadd.f32 %v850, %v969
    %v1011 = vadd.f32 %v851, %v971
    %v1012 = vadd.f32 %v852, %v973
    %v1013 = vadd.f32 %v853, %v975
    %v1014 = vadd.f32 %v854, %v977
    %v1015 = vadd.f32 %v855, %v979
    %v1016 = vadd.f32 %v856, %v981
    %v1017 = vadd.f32 %v857, %v983
    %v1018 = vadd.f32 %v858, %v985
    %v1019 = vadd.f32 %v859, %v987
    %v1020 = vsel %vm539, %v476, 0.0
    %1021 = vadd.xlane.f32.xlu0 %v1020
    %v1022 = vpop.xlane.xlu0 %1021
    %v1023 = vsel %vm539, %v478, 0.0
    %1024 = vadd.xlane.f32.xlu0 %v1023
    %v1025 = vpop.xlane.xlu0 %1024
    %v1026 = vsel %vm539, %v480, 0.0
    %1027 = vadd.xlane.f32.xlu0 %v1026
    %v1028 = vpop.xlane.xlu0 %1027
    %v1029 = vsel %vm539, %v482, 0.0
    %1030 = vadd.xlane.f32.xlu0 %v1029
    %v1031 = vpop.xlane.xlu0 %1030
    %v1032 = vsel %vm539, %v484, 0.0
    %1033 = vadd.xlane.f32.xlu0 %v1032
    %v1034 = vpop.xlane.xlu0 %1033
    %v1035 = vsel %vm539, %v486, 0.0
    %1036 = vadd.xlane.f32.xlu0 %v1035
    %v1037 = vpop.xlane.xlu0 %1036
    %v1038 = vsel %vm539, %v488, 0.0
    %1039 = vadd.xlane.f32.xlu0 %v1038
    %v1040 = vpop.xlane.xlu0 %1039
    %v1041 = vsel %vm539, %v490, 0.0
    %1042 = vadd.xlane.f32.xlu0 %v1041
    %v1043 = vpop.xlane.xlu0 %1042
    %v1044 = vsel %vm539, %v492, 0.0
    %1045 = vadd.xlane.f32.xlu0 %v1044
    %v1046 = vpop.xlane.xlu0 %1045
    %v1047 = vsel %vm539, %v494, 0.0
    %1048 = vadd.xlane.f32.xlu0 %v1047
    %v1049 = vpop.xlane.xlu0 %1048
    %v1050 = vsel %vm539, %v496, 0.0
    %1051 = vadd.xlane.f32.xlu0 %v1050
    %v1052 = vpop.xlane.xlu0 %1051
    %v1053 = vsel %vm539, %v498, 0.0
    %1054 = vadd.xlane.f32.xlu0 %v1053
    %v1055 = vpop.xlane.xlu0 %1054
    %v1056 = vsel %vm539, %v500, 0.0
    %1057 = vadd.xlane.f32.xlu0 %v1056
    %v1058 = vpop.xlane.xlu0 %1057
    %v1059 = vsel %vm539, %v502, 0.0
    %1060 = vadd.xlane.f32.xlu0 %v1059
    %v1061 = vpop.xlane.xlu0 %1060
    %v1062 = vsel %vm539, %v504, 0.0
    %1063 = vadd.xlane.f32.xlu0 %v1062
    %v1064 = vpop.xlane.xlu0 %1063
    %v1065 = vsel %vm539, %v506, 0.0
    %1066 = vadd.xlane.f32.xlu0 %v1065
    %v1067 = vpop.xlane.xlu0 %1066
    %v1068 = vmul.f32 %v1022, 0.125
    %v1069 = vmul.f32 %v1025, 0.125
    %v1070 = vmul.f32 %v1028, 0.125
    %v1071 = vmul.f32 %v1031, 0.125
    %v1072 = vmul.f32 %v1034, 0.125
    %v1073 = vmul.f32 %v1037, 0.125
    %v1074 = vmul.f32 %v1040, 0.125
    %v1075 = vmul.f32 %v1043, 0.125
    %v1076 = vmul.f32 %v1046, 0.125
    %v1077 = vmul.f32 %v1049, 0.125
    %v1078 = vmul.f32 %v1052, 0.125
    %v1079 = vmul.f32 %v1055, 0.125
    %v1080 = vmul.f32 %v1058, 0.125
    %v1081 = vmul.f32 %v1061, 0.125
    %v1082 = vmul.f32 %v1064, 0.125
    %v1083 = vmul.f32 %v1067, 0.125
    %v1084 = vmul.f32 %v1068, %v283
    %v1085 = vmul.f32 %v1069, %v284
    %v1086 = vmul.f32 %v1070, %v285
    %v1087 = vmul.f32 %v1071, %v286
    %v1088 = vmul.f32 %v1072, %v287
    %v1089 = vmul.f32 %v1073, %v288
    %v1090 = vmul.f32 %v1074, %v289
    %v1091 = vmul.f32 %v1075, %v290
    %v1092 = vmul.f32 %v1076, %v291
    %v1093 = vmul.f32 %v1077, %v292
    %v1094 = vmul.f32 %v1078, %v293
    %v1095 = vmul.f32 %v1079, %v294
    %v1096 = vmul.f32 %v1080, %v295
    %v1097 = vmul.f32 %v1081, %v296
    %v1098 = vmul.f32 %v1082, %v297
    %v1099 = vmul.f32 %v1083, %v298
    %1116 = vrot.lane.b32.xlu0 %v1084, 32
    %v1117 = vpop.permute.xlu0 %1116
    %1118 = vrot.lane.b32.xlu0 %v1085, 32
    %v1119 = vpop.permute.xlu0 %1118
    %1120 = vrot.lane.b32.xlu0 %v1086, 32
    %v1121 = vpop.permute.xlu0 %1120
    %1122 = vrot.lane.b32.xlu0 %v1087, 32
    %v1123 = vpop.permute.xlu0 %1122
    %1124 = vrot.lane.b32.xlu0 %v1088, 32
    %v1125 = vpop.permute.xlu0 %1124
    %1126 = vrot.lane.b32.xlu0 %v1089, 32
    %v1127 = vpop.permute.xlu0 %1126
    %1128 = vrot.lane.b32.xlu0 %v1090, 32
    %v1129 = vpop.permute.xlu0 %1128
    %1130 = vrot.lane.b32.xlu0 %v1091, 32
    %v1131 = vpop.permute.xlu0 %1130
    %1132 = vrot.lane.b32.xlu0 %v1092, 32
    %v1133 = vpop.permute.xlu0 %1132
    %1134 = vrot.lane.b32.xlu0 %v1093, 32
    %v1135 = vpop.permute.xlu0 %1134
    %1136 = vrot.lane.b32.xlu0 %v1094, 32
    %v1137 = vpop.permute.xlu0 %1136
    %1138 = vrot.lane.b32.xlu0 %v1095, 32
    %v1139 = vpop.permute.xlu0 %1138
    %1140 = vrot.lane.b32.xlu0 %v1096, 32
    %v1141 = vpop.permute.xlu0 %1140
    %1142 = vrot.lane.b32.xlu0 %v1097, 32
    %v1143 = vpop.permute.xlu0 %1142
    %1144 = vrot.lane.b32.xlu0 %v1098, 32
    %v1145 = vpop.permute.xlu0 %1144
    %1146 = vrot.lane.b32.xlu0 %v1099, 32
    %v1147 = vpop.permute.xlu0 %1146
    %v1164 = vadd.f32 %v1004, %v1117
    %v1165 = vadd.f32 %v1005, %v1119
    %v1166 = vadd.f32 %v1006, %v1121
    %v1167 = vadd.f32 %v1007, %v1123
    %v1168 = vadd.f32 %v1008, %v1125
    %v1169 = vadd.f32 %v1009, %v1127
    %v1170 = vadd.f32 %v1010, %v1129
    %v1171 = vadd.f32 %v1011, %v1131
    %v1172 = vadd.f32 %v1012, %v1133
    %v1173 = vadd.f32 %v1013, %v1135
    %v1174 = vadd.f32 %v1014, %v1137
    %v1175 = vadd.f32 %v1015, %v1139
    %v1176 = vadd.f32 %v1016, %v1141
    %v1177 = vadd.f32 %v1017, %v1143
    %v1178 = vadd.f32 %v1018, %v1145
    %v1179 = vadd.f32 %v1019, %v1147
    %vm1180 = vcmp.gt.f32.partialorder %v1164, 0.0
    %vm1181 = vcmp.gt.f32.partialorder %v1165, 0.0
    %vm1182 = vcmp.gt.f32.partialorder %v1166, 0.0
    %vm1183 = vcmp.gt.f32.partialorder %v1167, 0.0
    %vm1184 = vcmp.gt.f32.partialorder %v1168, 0.0
    %vm1185 = vcmp.gt.f32.partialorder %v1169, 0.0
    %vm1186 = vcmp.gt.f32.partialorder %v1170, 0.0
    %vm1187 = vcmp.gt.f32.partialorder %v1171, 0.0
    %vm1188 = vcmp.gt.f32.partialorder %v1172, 0.0
    %vm1189 = vcmp.gt.f32.partialorder %v1173, 0.0
    %vm1190 = vcmp.gt.f32.partialorder %v1174, 0.0
    %vm1191 = vcmp.gt.f32.partialorder %v1175, 0.0
    %vm1192 = vcmp.gt.f32.partialorder %v1176, 0.0
    %vm1193 = vcmp.gt.f32.partialorder %v1177, 0.0
    %vm1194 = vcmp.gt.f32.partialorder %v1178, 0.0
    %vm1195 = vcmp.gt.f32.partialorder %v1179, 0.0
    %v1196 = vmin.f32 %v1164, 0.0
    %v1197 = vmin.f32 %v1165, 0.0
    %v1198 = vmin.f32 %v1166, 0.0
    %v1199 = vmin.f32 %v1167, 0.0
    %v1200 = vmin.f32 %v1168, 0.0
    %v1201 = vmin.f32 %v1169, 0.0
    %v1202 = vmin.f32 %v1170, 0.0
    %v1203 = vmin.f32 %v1171, 0.0
    %v1204 = vmin.f32 %v1172, 0.0
    %v1205 = vmin.f32 %v1173, 0.0
    %v1206 = vmin.f32 %v1174, 0.0
    %v1207 = vmin.f32 %v1175, 0.0
    %v1208 = vmin.f32 %v1176, 0.0
    %v1209 = vmin.f32 %v1177, 0.0
    %v1210 = vmin.f32 %v1178, 0.0
    %v1211 = vmin.f32 %v1179, 0.0
    %v1212 = vmul.f32 %v1196, 1.442695
    %v1213 = vpow.pop %v1212
    %v1214 = vmul.f32 %v1197, 1.442695
    %v1215 = vpow.pop %v1214
    %v1216 = vmul.f32 %v1198, 1.442695
    %v1217 = vpow.pop %v1216
    %v1218 = vmul.f32 %v1199, 1.442695
    %v1219 = vpow.pop %v1218
    %v1220 = vmul.f32 %v1200, 1.442695
    %v1221 = vpow.pop %v1220
    %v1222 = vmul.f32 %v1201, 1.442695
    %v1223 = vpow.pop %v1222
    %v1224 = vmul.f32 %v1202, 1.442695
    %v1225 = vpow.pop %v1224
    %v1226 = vmul.f32 %v1203, 1.442695
    %v1227 = vpow.pop %v1226
    %v1228 = vmul.f32 %v1204, 1.442695
    %v1229 = vpow.pop %v1228
    %v1230 = vmul.f32 %v1205, 1.442695
    %v1231 = vpow.pop %v1230
    %v1232 = vmul.f32 %v1206, 1.442695
    %v1233 = vpow.pop %v1232
    %v1234 = vmul.f32 %v1207, 1.442695
    %v1235 = vpow.pop %v1234
    %v1236 = vmul.f32 %v1208, 1.442695
    %v1237 = vpow.pop %v1236
    %v1238 = vmul.f32 %v1209, 1.442695
    %v1239 = vpow.pop %v1238
    %v1240 = vmul.f32 %v1210, 1.442695
    %v1241 = vpow.pop %v1240
    %v1242 = vmul.f32 %v1211, 1.442695
    %v1243 = vpow.pop %v1242
    %v1244 = vsub.f32 %v1213, 1.0
    %v1245 = vsub.f32 %v1215, 1.0
    %v1246 = vsub.f32 %v1217, 1.0
    %v1247 = vsub.f32 %v1219, 1.0
    %v1248 = vsub.f32 %v1221, 1.0
    %v1249 = vsub.f32 %v1223, 1.0
    %v1250 = vsub.f32 %v1225, 1.0
    %v1251 = vsub.f32 %v1227, 1.0
    %v1252 = vsub.f32 %v1229, 1.0
    %v1253 = vsub.f32 %v1231, 1.0
    %v1254 = vsub.f32 %v1233, 1.0
    %v1255 = vsub.f32 %v1235, 1.0
    %v1256 = vsub.f32 %v1237, 1.0
    %v1257 = vsub.f32 %v1239, 1.0
    %v1258 = vsub.f32 %v1241, 1.0
    %v1259 = vsub.f32 %v1243, 1.0
    %v1260 = vsel %vm1180, %v1164, %v1244
    %v1261 = vsel %vm1181, %v1165, %v1245
    %v1262 = vsel %vm1182, %v1166, %v1246
    %v1263 = vsel %vm1183, %v1167, %v1247
    %v1264 = vsel %vm1184, %v1168, %v1248
    %v1265 = vsel %vm1185, %v1169, %v1249
    %v1266 = vsel %vm1186, %v1170, %v1250
    %v1267 = vsel %vm1187, %v1171, %v1251
    %v1268 = vsel %vm1188, %v1172, %v1252
    %v1269 = vsel %vm1189, %v1173, %v1253
    %v1270 = vsel %vm1190, %v1174, %v1254
    %v1271 = vsel %vm1191, %v1175, %v1255
    %v1272 = vsel %vm1192, %v1176, %v1256
    %v1273 = vsel %vm1193, %v1177, %v1257
    %v1274 = vsel %vm1194, %v1178, %v1258
    %v1275 = vsel %vm1195, %v1179, %v1259
    %1292 = vrot.lane.b32.xlu0 %v299, 96
    %v1293 = vpop.permute.xlu0 %1292
    %1294 = vrot.lane.b32.xlu0 %v300, 96
    %v1295 = vpop.permute.xlu0 %1294
    %1296 = vrot.lane.b32.xlu0 %v301, 96
    %v1297 = vpop.permute.xlu0 %1296
    %1298 = vrot.lane.b32.xlu0 %v302, 96
    %v1299 = vpop.permute.xlu0 %1298
    %1300 = vrot.lane.b32.xlu0 %v303, 96
    %v1301 = vpop.permute.xlu0 %1300
    %1302 = vrot.lane.b32.xlu0 %v304, 96
    %v1303 = vpop.permute.xlu0 %1302
    %1304 = vrot.lane.b32.xlu0 %v305, 96
    %v1305 = vpop.permute.xlu0 %1304
    %1306 = vrot.lane.b32.xlu0 %v306, 96
    %v1307 = vpop.permute.xlu0 %1306
    %1308 = vrot.lane.b32.xlu0 %v307, 96
    %v1309 = vpop.permute.xlu0 %1308
    %1310 = vrot.lane.b32.xlu0 %v308, 96
    %v1311 = vpop.permute.xlu0 %1310
    %1312 = vrot.lane.b32.xlu0 %v309, 96
    %v1313 = vpop.permute.xlu0 %1312
    %1314 = vrot.lane.b32.xlu0 %v310, 96
    %v1315 = vpop.permute.xlu0 %1314
    %1316 = vrot.lane.b32.xlu0 %v311, 96
    %v1317 = vpop.permute.xlu0 %1316
    %1318 = vrot.lane.b32.xlu0 %v312, 96
    %v1319 = vpop.permute.xlu0 %1318
    %1320 = vrot.lane.b32.xlu0 %v313, 96
    %v1321 = vpop.permute.xlu0 %1320
    %1322 = vrot.lane.b32.xlu0 %v314, 96
    %v1323 = vpop.permute.xlu0 %1322
    %v1340 = vmul.f32 %v1260, %v1293
    %v1341 = vmul.f32 %v1261, %v1295
    %v1342 = vmul.f32 %v1262, %v1297
    %v1343 = vmul.f32 %v1263, %v1299
    %v1344 = vmul.f32 %v1264, %v1301
    %v1345 = vmul.f32 %v1265, %v1303
    %v1346 = vmul.f32 %v1266, %v1305
    %v1347 = vmul.f32 %v1267, %v1307
    %v1348 = vmul.f32 %v1268, %v1309
    %v1349 = vmul.f32 %v1269, %v1311
    %v1350 = vmul.f32 %v1270, %v1313
    %v1351 = vmul.f32 %v1271, %v1315
    %v1352 = vmul.f32 %v1272, %v1317
    %v1353 = vmul.f32 %v1273, %v1319
    %v1354 = vmul.f32 %v1274, %v1321
    %v1355 = vmul.f32 %v1275, %v1323
    %v1356 = vld [vmem:[%s4] sm:$0x1]
    %v1358 = vlaneseq
    %v1359 = vshrl.u32 %v1358, 7
    %v1360 = vsub.s32 0, %v1359
    %v1361 = vrot.slane %v1356, %v1360
    %1362 = vrot.lane.b32.xlu0 %v1361, 64
    %v1363 = vpop.permute.xlu0 %1362
    %v1365 = vmul.f32 %v315, %v1363
    %v1366 = vmul.f32 %v316, %v1363
    %v1367 = vmul.f32 %v317, %v1363
    %v1368 = vmul.f32 %v318, %v1363
    %v1369 = vmul.f32 %v319, %v1363
    %v1370 = vmul.f32 %v320, %v1363
    %v1371 = vmul.f32 %v321, %v1363
    %v1372 = vmul.f32 %v322, %v1363
    %v1373 = vmul.f32 %v323, %v1363
    %v1374 = vmul.f32 %v324, %v1363
    %v1375 = vmul.f32 %v325, %v1363
    %v1376 = vmul.f32 %v326, %v1363
    %v1377 = vmul.f32 %v327, %v1363
    %v1378 = vmul.f32 %v328, %v1363
    %v1379 = vmul.f32 %v329, %v1363
    %v1380 = vmul.f32 %v330, %v1363
    %1397 = vrot.lane.b32.xlu0 %v1365, 64
    %v1398 = vpop.permute.xlu0 %1397
    %1399 = vrot.lane.b32.xlu0 %v1366, 64
    %v1400 = vpop.permute.xlu0 %1399
    %1401 = vrot.lane.b32.xlu0 %v1367, 64
    %v1402 = vpop.permute.xlu0 %1401
    %1403 = vrot.lane.b32.xlu0 %v1368, 64
    %v1404 = vpop.permute.xlu0 %1403
    %1405 = vrot.lane.b32.xlu0 %v1369, 64
    %v1406 = vpop.permute.xlu0 %1405
    %1407 = vrot.lane.b32.xlu0 %v1370, 64
    %v1408 = vpop.permute.xlu0 %1407
    %1409 = vrot.lane.b32.xlu0 %v1371, 64
    %v1410 = vpop.permute.xlu0 %1409
    %1411 = vrot.lane.b32.xlu0 %v1372, 64
    %v1412 = vpop.permute.xlu0 %1411
    %1413 = vrot.lane.b32.xlu0 %v1373, 64
    %v1414 = vpop.permute.xlu0 %1413
    %1415 = vrot.lane.b32.xlu0 %v1374, 64
    %v1416 = vpop.permute.xlu0 %1415
    %1417 = vrot.lane.b32.xlu0 %v1375, 64
    %v1418 = vpop.permute.xlu0 %1417
    %1419 = vrot.lane.b32.xlu0 %v1376, 64
    %v1420 = vpop.permute.xlu0 %1419
    %1421 = vrot.lane.b32.xlu0 %v1377, 64
    %v1422 = vpop.permute.xlu0 %1421
    %1423 = vrot.lane.b32.xlu0 %v1378, 64
    %v1424 = vpop.permute.xlu0 %1423
    %1425 = vrot.lane.b32.xlu0 %v1379, 64
    %v1426 = vpop.permute.xlu0 %1425
    %1427 = vrot.lane.b32.xlu0 %v1380, 64
    %v1428 = vpop.permute.xlu0 %1427
    %v1445 = vadd.f32 %v1340, %v1398
    %v1446 = vadd.f32 %v1341, %v1400
    %v1447 = vadd.f32 %v1342, %v1402
    %v1448 = vadd.f32 %v1343, %v1404
    %v1449 = vadd.f32 %v1344, %v1406
    %v1450 = vadd.f32 %v1345, %v1408
    %v1451 = vadd.f32 %v1346, %v1410
    %v1452 = vadd.f32 %v1347, %v1412
    %v1453 = vadd.f32 %v1348, %v1414
    %v1454 = vadd.f32 %v1349, %v1416
    %v1455 = vadd.f32 %v1350, %v1418
    %v1456 = vadd.f32 %v1351, %v1420
    %v1457 = vadd.f32 %v1352, %v1422
    %v1458 = vadd.f32 %v1353, %v1424
    %v1459 = vadd.f32 %v1354, %v1426
    %v1460 = vadd.f32 %v1355, %v1428
    %v1461 = vsel %vm73, %v1445, 0.0
    %1462 = vadd.xlane.f32.xlu0 %v1461
    %v1463 = vpop.xlane.xlu0 %1462
    %v1464 = vsel %vm73, %v1446, 0.0
    %1465 = vadd.xlane.f32.xlu0 %v1464
    %v1466 = vpop.xlane.xlu0 %1465
    %v1467 = vsel %vm73, %v1447, 0.0
    %1468 = vadd.xlane.f32.xlu0 %v1467
    %v1469 = vpop.xlane.xlu0 %1468
    %v1470 = vsel %vm73, %v1448, 0.0
    %1471 = vadd.xlane.f32.xlu0 %v1470
    %v1472 = vpop.xlane.xlu0 %1471
    %v1473 = vsel %vm73, %v1449, 0.0
    %1474 = vadd.xlane.f32.xlu0 %v1473
    %v1475 = vpop.xlane.xlu0 %1474
    %v1476 = vsel %vm73, %v1450, 0.0
    %1477 = vadd.xlane.f32.xlu0 %v1476
    %v1478 = vpop.xlane.xlu0 %1477
    %v1479 = vsel %vm73, %v1451, 0.0
    %1480 = vadd.xlane.f32.xlu0 %v1479
    %v1481 = vpop.xlane.xlu0 %1480
    %v1482 = vsel %vm73, %v1452, 0.0
    %1483 = vadd.xlane.f32.xlu0 %v1482
    %v1484 = vpop.xlane.xlu0 %1483
    %v1485 = vsel %vm73, %v1453, 0.0
    %1486 = vadd.xlane.f32.xlu0 %v1485
    %v1487 = vpop.xlane.xlu0 %1486
    %v1488 = vsel %vm73, %v1454, 0.0
    %1489 = vadd.xlane.f32.xlu0 %v1488
    %v1490 = vpop.xlane.xlu0 %1489
    %v1491 = vsel %vm73, %v1455, 0.0
    %1492 = vadd.xlane.f32.xlu0 %v1491
    %v1493 = vpop.xlane.xlu0 %1492
    %v1494 = vsel %vm73, %v1456, 0.0
    %1495 = vadd.xlane.f32.xlu0 %v1494
    %v1496 = vpop.xlane.xlu0 %1495
    %v1497 = vsel %vm73, %v1457, 0.0
    %1498 = vadd.xlane.f32.xlu0 %v1497
    %v1499 = vpop.xlane.xlu0 %1498
    %v1500 = vsel %vm73, %v1458, 0.0
    %1501 = vadd.xlane.f32.xlu0 %v1500
    %v1502 = vpop.xlane.xlu0 %1501
    %v1503 = vsel %vm73, %v1459, 0.0
    %1504 = vadd.xlane.f32.xlu0 %v1503
    %v1505 = vpop.xlane.xlu0 %1504
    %v1506 = vsel %vm73, %v1460, 0.0
    %1507 = vadd.xlane.f32.xlu0 %v1506
    %v1508 = vpop.xlane.xlu0 %1507
    %v1509 = vadd.f32 %v1463, %v191
    %v1510 = vadd.f32 %v1466, %v197
    %v1511 = vadd.f32 %v1469, %v203
    %v1512 = vadd.f32 %v1472, %v209
    %v1513 = vadd.f32 %v1475, %v215
    %v1514 = vadd.f32 %v1478, %v221
    %v1515 = vadd.f32 %v1481, %v227
    %v1516 = vadd.f32 %v1484, %v233
    %v1517 = vadd.f32 %v1487, %v239
    %v1518 = vadd.f32 %v1490, %v245
    %v1519 = vadd.f32 %v1493, %v251
    %v1520 = vadd.f32 %v1496, %v257
    %v1521 = vadd.f32 %v1499, %v263
    %v1522 = vadd.f32 %v1502, %v269
    %v1523 = vadd.f32 %v1505, %v275
    %v1524 = vadd.f32 %v1508, %v281
    %v1525 = vsub.f32 %v1509, %v588
    %v1526 = vsub.f32 %v1510, %v589
    %v1527 = vsub.f32 %v1511, %v590
    %v1528 = vsub.f32 %v1512, %v591
    %v1529 = vsub.f32 %v1513, %v592
    %v1530 = vsub.f32 %v1514, %v593
    %v1531 = vsub.f32 %v1515, %v594
    %v1532 = vsub.f32 %v1516, %v595
    %v1533 = vsub.f32 %v1517, %v596
    %v1534 = vsub.f32 %v1518, %v597
    %v1535 = vsub.f32 %v1519, %v598
    %v1536 = vsub.f32 %v1520, %v599
    %v1537 = vsub.f32 %v1521, %v600
    %v1538 = vsub.f32 %v1522, %v601
    %v1539 = vsub.f32 %v1523, %v602
    %v1540 = vsub.f32 %v1524, %v603
    %1542 = vset.pattern.permute.xlu0 96
    %1543 = vperm.xlu0 %1542, %v1525
    %v1544 = vpop.permute.xlu0 %1543
    %1547 = vset.pattern.permute.xlu0 96
    %1548 = vperm.xlu0 %1547, %v1526
    %v1549 = vpop.permute.xlu0 %1548
    %1552 = vset.pattern.permute.xlu0 96
    %1553 = vperm.xlu0 %1552, %v1527
    %v1554 = vpop.permute.xlu0 %1553
    %1557 = vset.pattern.permute.xlu0 96
    %1558 = vperm.xlu0 %1557, %v1528
    %v1559 = vpop.permute.xlu0 %1558
    %1562 = vset.pattern.permute.xlu0 96
    %1563 = vperm.xlu0 %1562, %v1529
    %v1564 = vpop.permute.xlu0 %1563
    %1567 = vset.pattern.permute.xlu0 96
    %1568 = vperm.xlu0 %1567, %v1530
    %v1569 = vpop.permute.xlu0 %1568
    %1572 = vset.pattern.permute.xlu0 96
    %1573 = vperm.xlu0 %1572, %v1531
    %v1574 = vpop.permute.xlu0 %1573
    %1577 = vset.pattern.permute.xlu0 96
    %1578 = vperm.xlu0 %1577, %v1532
    %v1579 = vpop.permute.xlu0 %1578
    %1582 = vset.pattern.permute.xlu0 96
    %1583 = vperm.xlu0 %1582, %v1533
    %v1584 = vpop.permute.xlu0 %1583
    %1587 = vset.pattern.permute.xlu0 96
    %1588 = vperm.xlu0 %1587, %v1534
    %v1589 = vpop.permute.xlu0 %1588
    %1592 = vset.pattern.permute.xlu0 96
    %1593 = vperm.xlu0 %1592, %v1535
    %v1594 = vpop.permute.xlu0 %1593
    %1597 = vset.pattern.permute.xlu0 96
    %1598 = vperm.xlu0 %1597, %v1536
    %v1599 = vpop.permute.xlu0 %1598
    %1602 = vset.pattern.permute.xlu0 96
    %1603 = vperm.xlu0 %1602, %v1537
    %v1604 = vpop.permute.xlu0 %1603
    %1607 = vset.pattern.permute.xlu0 96
    %1608 = vperm.xlu0 %1607, %v1538
    %v1609 = vpop.permute.xlu0 %1608
    %1612 = vset.pattern.permute.xlu0 96
    %1613 = vperm.xlu0 %1612, %v1539
    %v1614 = vpop.permute.xlu0 %1613
    %1617 = vset.pattern.permute.xlu0 96
    %1618 = vperm.xlu0 %1617, %v1540
    %v1619 = vpop.permute.xlu0 %1618
    %v1621 = vadd.f32 %v523, %v1544
    %v1622 = vadd.f32 %v524, %v1549
    %v1623 = vadd.f32 %v525, %v1554
    %v1624 = vadd.f32 %v526, %v1559
    %v1625 = vadd.f32 %v527, %v1564
    %v1626 = vadd.f32 %v528, %v1569
    %v1627 = vadd.f32 %v529, %v1574
    %v1628 = vadd.f32 %v530, %v1579
    %v1629 = vadd.f32 %v531, %v1584
    %v1630 = vadd.f32 %v532, %v1589
    %v1631 = vadd.f32 %v533, %v1594
    %v1632 = vadd.f32 %v534, %v1599
    %v1633 = vadd.f32 %v535, %v1604
    %v1634 = vadd.f32 %v536, %v1609
    %v1635 = vadd.f32 %v537, %v1614
    %v1636 = vadd.f32 %v538, %v1619
    %1638 = vrot.lane.b32.xlu0 %v1622, 8
    %v1639 = vpop.permute.xlu0 %1638
    %1642 = vrot.lane.b32.xlu0 %v1623, 16
    %v1643 = vpop.permute.xlu0 %1642
    %1646 = vrot.lane.b32.xlu0 %v1624, 24
    %v1647 = vpop.permute.xlu0 %1646
    %1650 = vrot.lane.b32.xlu0 %v1625, 32
    %v1651 = vpop.permute.xlu0 %1650
    %1654 = vrot.lane.b32.xlu0 %v1626, 40
    %v1655 = vpop.permute.xlu0 %1654
    %1658 = vrot.lane.b32.xlu0 %v1627, 48
    %v1659 = vpop.permute.xlu0 %1658
    %1662 = vrot.lane.b32.xlu0 %v1628, 56
    %v1663 = vpop.permute.xlu0 %1662
    %1666 = vrot.lane.b32.xlu0 %v1629, 64
    %v1667 = vpop.permute.xlu0 %1666
    %1670 = vrot.lane.b32.xlu0 %v1630, 72
    %v1671 = vpop.permute.xlu0 %1670
    %1674 = vrot.lane.b32.xlu0 %v1631, 80
    %v1675 = vpop.permute.xlu0 %1674
    %1678 = vrot.lane.b32.xlu0 %v1632, 88
    %v1679 = vpop.permute.xlu0 %1678
    %1682 = vrot.lane.b32.xlu0 %v1633, 96
    %v1683 = vpop.permute.xlu0 %1682
    %1686 = vrot.lane.b32.xlu0 %v1634, 104
    %v1687 = vpop.permute.xlu0 %1686
    %1690 = vrot.lane.b32.xlu0 %v1635, 112
    %v1691 = vpop.permute.xlu0 %1690
    %1694 = vrot.lane.b32.xlu0 %v1636, 120
    %v1695 = vpop.permute.xlu0 %1694
    %v1697 = vsel %vm539, %v1621, %v1639
    %vm1698 = vcmask 130048
    %v1699 = vsel %vm1698, %v1697, %v1643
    %vm1700 = vcmask 195584
    %v1701 = vsel %vm1700, %v1699, %v1647
    %v1702 = vsel %vm73, %v1701, %v1651
    %vm1703 = vcmask 326656
    %v1704 = vsel %vm1703, %v1702, %v1655
    %vm1705 = vcmask 392192
    %v1706 = vsel %vm1705, %v1704, %v1659
    %vm1707 = vcmask 457728
    %v1708 = vsel %vm1707, %v1706, %v1663
    %vm1709 = vcmask 523264
    %v1710 = vsel %vm1709, %v1708, %v1667
    %vm1711 = vcmask 588800
    %v1712 = vsel %vm1711, %v1710, %v1671
    %vm1713 = vcmask 654336
    %v1714 = vsel %vm1713, %v1712, %v1675
    %vm1715 = vcmask 719872
    %v1716 = vsel %vm1715, %v1714, %v1679
    %vm1717 = vcmask 785408
    %v1718 = vsel %vm1717, %v1716, %v1683
    %vm1719 = vcmask 850944
    %v1720 = vsel %vm1719, %v1718, %v1687
    %vm1721 = vcmask 916480
    %v1722 = vsel %vm1721, %v1720, %v1691
    %vm1723 = vcmask 982016
    %v1724 = vsel %vm1723, %v1722, %v1695
    %1725 = vst [vmem:[#allocation2] sm:$0xff] %v1724
    // Predicated region
    $region22: #{tpu_custom_call.1} parent=1 // pred_check
      _
    $region23: #{tpu_custom_call.1} parent=1 // pred_check_branch
      %1727 = sbr.rel (0) target = $region25
    $region24: #{tpu_custom_call.1} parent=1 // pred_region
      %s1729 = ssub.s32 128, 128
      %1730 = vsyncadd [#allocation3], %s1729
      %s1732 = sshll.u32 [#allocation2], 4
      %s1733 = int_to_ptr.vmem [resolvable:$true] %s1732
      %1735 = dma.vmem_to_hbm [thread:$0]  %s1733, 128, %s5, [#allocation3]
    $region25: #{tpu_custom_call.1} parent=1 // pred_fallthru
      _
    // Predicated region
    $region26: #{tpu_custom_call.1} parent=1 // pred_check
      _
    $region27: #{tpu_custom_call.1} parent=1 // pred_check_branch
      %1737 = sbr.rel (0) target = $region29
    $region28: #{tpu_custom_call.1} parent=1 // pred_region
      %1738 = dma.done [#allocation3], 128
    $region29: #{tpu_custom_call.1} parent=1 // pred_fallthru
      _
    %1739 = vsyncpa [#allocation3], 1

</llo_original>
